<compile_context>
chip_gen: v7x
topology: tpu7x:2x2x1
jax: 0.10.0
libtpu: 0.0.40
codegen_flags: <defaults>
</compile_context>

<pallas_src>
import numpy as np
import jax
import jax.numpy as jnp
from jax import lax
from jax.experimental import pallas as pl
from jax.experimental.pallas import tpu as pltpu

KSIZE = 5  # conv kernel size
_MIB = 1 << 20


# ---------------------------------------------------------------------------
# VMEM accounting helpers (pad-aware, per TPU generation)
# ---------------------------------------------------------------------------
def _round_up(x, m):
    return ((x + m - 1) // m) * m


def _padded_bytes(shape, dtype):
    """Physical VMEM footprint: last dim -> 128 lanes, 2nd-to-last -> sublane mult."""
    itemsize = np.dtype(dtype).itemsize
    sub = max(1, 32 // itemsize)          # 8 for f32, 16 for bf16
    s = list(shape)
    if len(s) >= 1:
        s[-1] = _round_up(s[-1], 128)
    if len(s) >= 2:
        s[-2] = _round_up(s[-2], sub)
    total = 1
    for d in s:
        total *= d
    return total * itemsize


def _vmem_budget():
    """(scratch budget, vmem_limit_bytes, split_batch_for_two_cores)."""
    cap = None
    try:
        cap = int(getattr(pltpu.get_tpu_info(), "vmem_capacity_bytes", 0)) or None
    except Exception:
        cap = None
    kind = ""
    try:
        kind = jax.devices()[0].device_kind.lower()
    except Exception:
        pass
    big = any(t in kind for t in ("v5", "v6")) or (cap is not None and cap >= 112 * _MIB)
    if big:
        # v5e / v6e: 128 MiB VMEM, single TensorCore per chip.
        budget, limit, split = 80 * _MIB, 100 * _MIB, False
    else:
        # v7x (64 MiB per TC, 2 TCs) or unknown: conservative, keep >=2 grid
        # steps so dimension_semantics=("parallel",) feeds both TensorCores.
        budget, limit, split = 36 * _MIB, 48 * _MIB, True
    if cap is not None:
        limit = min(limit, cap * 3 // 4)
        budget = min(budget, limit * 4 // 5)
    return budget, limit, split


# ---------------------------------------------------------------------------
# Kernel 1: fused conv stack (3 x [conv1d 'same' k=5 + bias + ReLU + MaxPool(2,2)])
# ---------------------------------------------------------------------------
def _conv_relu_pool(h, w_ref, b_ref, hp_ref, cols_ref):
    """One conv block on a channels-last (Bt, Lc, Cin) value; returns (Bt, Lc//2, Cout)."""
    bt, lc, cin = h.shape
    kcin, cout = w_ref.shape
    k_taps = kcin // cin
    pad = (k_taps - 1) // 2
    m = bt * lc

    # Zero halo + body, all in VMEM (no HBM-side jnp.pad copy).
    hp_ref[:, 0:pad, :] = jnp.zeros((bt, pad, cin), h.dtype)
    hp_ref[:, pad + lc:pad + lc + pad, :] = jnp.zeros((bt, pad, cin), h.dtype)
    hp_ref[:, pad:pad + lc, :] = h

    # im2col with lane-grouped writes: bundle ceil(128/cin) adjacent taps per
    # store so layer-2's 64-lane slivers become full 128-lane slabs and layer-1
    # becomes a single store; layer 3 (cin=128) is already lane-aligned.
    group = max(1, 128 // cin)
    k = 0
    while k < k_taps:                                      # static unroll (K=5)
        g = min(group, k_taps - k)
        if g == 1:
            win = hp_ref[:, k:k + lc, :]
        else:
            win = jnp.concatenate(
                [hp_ref[:, k + t:k + t + lc, :] for t in range(g)], axis=-1)
        cols_ref[:, k * cin:(k + g) * cin] = win.reshape(m, g * cin)
        k += g

    # ONE MXU matmul (f32 accumulate), then MaxPool1d(2,2) directly on the
    # matmul result value; bias + ReLU applied AFTER pooling (mathematically
    # exact: max(a,b)+c == max(a+c,b+c) and ReLU is monotone).  No f32 act
    # scratch, no extra VMEM store + strided reloads per layer.
    y = jnp.dot(cols_ref[...], w_ref[...], preferred_element_type=jnp.float32)
    y = jnp.max(y.reshape(m // 2, 2, cout), axis=1)        # pairs never straddle
    y = jnp.maximum(y + b_ref[...], 0.0)                   # batch rows (Lc even)
    return y.astype(h.dtype).reshape(bt, lc // 2, cout)


def _conv_stack_kernel(x_ref, w1_ref, b1_ref, w2_ref, b2_ref, w3_ref, b3_ref,
                       o_ref, hp1, cols1, hp2, cols2, hp3, cols3):
    h = _conv_relu_pool(x_ref[...], w1_ref, b1_ref, hp1, cols1)
    h = _conv_relu_pool(h, w2_ref, b2_ref, hp2, cols2)
    h = _conv_relu_pool(h, w3_ref, b3_ref, hp3, cols3)
    o_ref[...] = h                                          # (Bt, L//8, 256) channels-last


def _conv_vmem_bytes(bt, L, cin, c1, c2, c3, cdt):
    """Pad-aware VMEM estimate for one grid step of the fused conv kernel."""
    k, f32 = KSIZE, jnp.float32
    halo = k - 1
    items = [
        # double-buffered pipeline blocks: input / output / weights / biases
        (2, (bt, L, cin), cdt), (2, (bt, L // 8, c3), cdt),
        (2, (k * cin, c1), cdt), (2, (1, c1), f32),
        (2, (k * c1, c2), cdt), (2, (1, c2), f32),
        (2, (k * c2, c3), cdt), (2, (1, c3), f32),
        # single-buffered scratch
        (1, (bt, L + halo, cin), cdt), (1, (bt * L, k * cin), cdt),
        (1, (bt, L // 2 + halo, c1), cdt), (1, (bt * (L // 2), k * c1), cdt),
        (1, (bt, L // 4 + halo, c2), cdt), (1, (bt * (L // 4), k * c2), cdt),
    ]
    total = sum(n * _padded_bytes(s, d) for n, s, d in items)
    # Allowance for compiler-materialized f32 matmul results / pooling temps.
    y_max = max(_padded_bytes((bt * L, c1), f32),
                _padded_bytes((bt * (L // 2), c2), f32),
                _padded_bytes((bt * (L // 4), c3), f32))
    return total + 2 * y_max + 2 * _MIB


def _pick_conv_batch_tile(B, L, cin, c1, c2, c3, cdt, budget, split):
    bt = 1
    for cand in range(min(B, 512), 0, -1):
        if _conv_vmem_bytes(cand, L, cin, c1, c2, c3, cdt) <= budget:
            bt = cand
            break
    if split and B >= 2:
        bt = min(bt, max(1, (B + 1) // 2))   # >=2 grid steps -> both v7x TCs busy
    return bt


def conv_stack(x, prep, *, block_b=None):
    B, L, cin = x.shape
    assert L % 8 == 0, "input_length must be divisible by 8 (three MaxPool1d(2,2))"
    cdt = prep["w1"].dtype
    x = x.astype(cdt)
    k = KSIZE
    halo = k - 1
    c1, c2, c3 = prep["w1"].shape[1], prep["w2"].shape[1], prep["w3"].shape[1]
    lf = L // 8
    budget, limit, split = _vmem_budget()
    bt = block_b or _pick_conv_batch_tile(B, L, cin, c1, c2, c3, cdt, budget, split)
    Bp = _round_up(B, bt)
    if Bp != B:
        x = jnp.pad(x, ((0, Bp - B), (0, 0), (0, 0)))

    # Weight/bias blocks have constant index maps, so the pipeline fetches them
    # once; their (double-buffer) allocation is included in the estimate above.
    out = pl.pallas_call(
        _conv_stack_kernel,
        out_shape=jax.ShapeDtypeStruct((Bp, lf, c3), cdt),
        grid=(Bp // bt,),
        in_specs=[
            pl.BlockSpec((bt, L, cin), lambda i: (i, 0, 0)),
            pl.BlockSpec((k * cin, c1), lambda i: (0, 0)),
            pl.BlockSpec((1, c1), lambda i: (0, 0)),
            pl.BlockSpec((k * c1, c2), lambda i: (0, 0)),
            pl.BlockSpec((1, c2), lambda i: (0, 0)),
            pl.BlockSpec((k * c2, c3), lambda i: (0, 0)),
            pl.BlockSpec((1, c3), lambda i: (0, 0)),
        ],
        out_specs=pl.BlockSpec((bt, lf, c3), lambda i: (i, 0, 0)),
        scratch_shapes=[
            pltpu.VMEM((bt, L + halo, cin), cdt),            # halo, layer 1
            pltpu.VMEM((bt * L, k * cin), cdt),              # im2col, layer 1
            pltpu.VMEM((bt, L // 2 + halo, c1), cdt),        # halo, layer 2
            pltpu.VMEM((bt * (L // 2), k * c1), cdt),        # im2col, layer 2
            pltpu.VMEM((bt, L // 4 + halo, c2), cdt),        # halo, layer 3
            pltpu.VMEM((bt * (L // 4), k * c2), cdt),        # im2col, layer 3
        ],
        compiler_params=pltpu.CompilerParams(
            dimension_semantics=("parallel",),
            vmem_limit_bytes=limit),
    )(x, prep["w1"], prep["b1"], prep["w2"], prep["b2"], prep["w3"], prep["b3"])
    return out[:B] if Bp != B else out


# ---------------------------------------------------------------------------
# Kernel 2: fc1 (fin-tiled, f32 accumulator) + ReLU + (dropout=identity) + fc2
# ---------------------------------------------------------------------------
def _mlp_kernel(x_ref, fw1_ref, fb1_ref, fw2_ref, fb2_ref, o_ref, acc_ref):
    j = pl.program_id(1)

    @pl.when(j == 0)
    def _():
        acc_ref[...] = jnp.zeros_like(acc_ref)

    acc_ref[...] += jnp.dot(x_ref[...], fw1_ref[...],
                            preferred_element_type=jnp.float32)

    @pl.when(j == pl.num_programs(1) - 1)
    def _():
        z = jnp.maximum(acc_ref[...] + fb1_ref[...], 0.0)
        # Dropout(p=0.5) is identity at inference.
        # TODO(synk): training-mode stochastic dropout not implemented.
        z = z.astype(fw2_ref.dtype)
        o_ref[...] = (jnp.dot(z, fw2_ref[...], preferred_element_type=jnp.float32)
                      + fb2_ref[...]).astype(o_ref.dtype)


def _mlp_vmem_bytes(bt, bk, H, ncp, cdt):
    f32 = jnp.float32
    items = [
        (2, (bt, bk), cdt), (2, (bk, H), cdt), (2, (1, H), f32),
        (2, (H, ncp), cdt), (2, (1, ncp), f32),
        (2, (bt, ncp), f32), (1, (bt, H), f32),
    ]
    return sum(n * _padded_bytes(s, d) for n, s, d in items) + _MIB


def _pick_fin_tile(fin, c3, H, cdt, max_bytes):
    """Largest contraction tile (multiple of c3) whose double-buffered fc1 weight
    block fits max_bytes; prefers keeping fw1 fully VMEM-resident (bk == fin)."""
    if fin % c3 or 2 * _padded_bytes((fin, H), cdt) <= max_bytes:
        return fin
    lf = fin // c3
    best = c3
    for d in range(1, lf + 1):
        if lf % d == 0 and 2 * _padded_bytes((c3 * d, H), cdt) <= max_bytes:
            best = c3 * d
    return best


def mlp_head(h_flat, prep, num_classes):
    B, fin = h_flat.shape
    cdt = prep["fw1"].dtype
    h_flat = h_flat.astype(cdt)
    H = prep["fw1"].shape[1]          # 128
    ncp = prep["fw2"].shape[1]        # 128 (lane-dense padded classes)
    c3 = prep["w3"].shape[1]          # 256
    budget, limit, split = _vmem_budget()

    # fc1 contraction tile: fw1 VMEM-resident (streamed from HBM once) if it fits.
    bk = _pick_fin_tile(fin, c3, H, cdt, budget // 2)
    nk = fin // bk

    # Batch tile: multiple of 16 (bf16 sublane packing), as large as fits.
    bt = 16
    for cand in (512, 384, 256, 192, 128, 96, 64, 48, 32, 16):
        if cand > _round_up(max(B, 1), 16):
            continue
        if _mlp_vmem_bytes(cand, bk, H, ncp, cdt) <= budget:
            bt = cand
            break
    if split and B > 16:
        bt = min(bt, _round_up((B + 1) // 2, 16))   # >=2 batch steps for 2 TCs

    Bp = _round_up(B, bt)                            # multiple of bt (and of 16)
    if Bp != B:
        h_flat = jnp.pad(h_flat, ((0, Bp - B), (0, 0)))

    out = pl.pallas_call(
        _mlp_kernel,
        out_shape=jax.ShapeDtypeStruct((Bp, ncp), jnp.float32),
        grid=(Bp // bt, nk),
        in_specs=[
            pl.BlockSpec((bt, bk), lambda i, j: (i, j)),
            pl.BlockSpec((bk, H), lambda i, j: (j, 0)),
            pl.BlockSpec((1, H), lambda i, j: (0, 0)),
            pl.BlockSpec((H, ncp), lambda i, j: (0, 0)),
            pl.BlockSpec((1, ncp), lambda i, j: (0, 0)),
        ],
        out_specs=pl.BlockSpec((bt, ncp), lambda i, j: (i, 0)),
        scratch_shapes=[pltpu.VMEM((bt, H), jnp.float32)],
        compiler_params=pltpu.CompilerParams(
            dimension_semantics=("parallel", "arbitrary"),
            vmem_limit_bytes=limit),
    )(h_flat, prep["fw1"], prep["fb1"], prep["fw2"], prep["fb2"])
    return out[:B, :num_classes]


# ---------------------------------------------------------------------------
# Parameter prep (one-time, outside the hot path) and full forward
# ---------------------------------------------------------------------------
def prepare_params(p, compute_dtype=jnp.bfloat16):
    """Reshape/permute/pad/cast raw params into the kernel-friendly layout."""
    k = KSIZE
    c3 = p["cw3"].shape[2]
    fin, H = p["fw1"].shape
    lf = fin // c3
    # Fold PyTorch's channel-major flatten (view on a (B, C, Lf) tensor) into
    # fc1's rows so the kernel consumes conv3's channels-last output directly.
    fw1_perm = p["fw1"].reshape(c3, lf, H).transpose(1, 0, 2).reshape(fin, H)
    nc = p["fw2"].shape[1]
    ncp = 128                                            # lane-dense padded logits
    fw2_pad = jnp.zeros((H, ncp), jnp.float32).at[:, :nc].set(p["fw2"])
    fb2_pad = jnp.zeros((1, ncp), jnp.float32).at[0, :nc].set(p["fb2"])
    cdt = compute_dtype
    return {
        "w1": p["cw1"].reshape(k * p["cw1"].shape[1], p["cw1"].shape[2]).astype(cdt),
        "b1": p["cb1"].reshape(1, -1).astype(jnp.float32),
        "w2": p["cw2"].reshape(k * p["cw2"].shape[1], p["cw2"].shape[2]).astype(cdt),
        "b2": p["cb2"].reshape(1, -1).astype(jnp.float32),
        "w3": p["cw3"].reshape(k * p["cw3"].shape[1], p["cw3"].shape[2]).astype(cdt),
        "b3": p["cb3"].reshape(1, -1).astype(jnp.float32),
        "fw1": fw1_perm.astype(cdt),
        "fb1": p["fb1"].reshape(1, -1).astype(jnp.float32),
        "fw2": fw2_pad.astype(cdt),
        "fb2": fb2_pad,
    }


def dna_cnn_forward(x, prep, *, num_classes=2):
    # x: (B, L, 4) channels-last
    h3 = conv_stack(x, prep)                 # (B, L//8, 256), VMEM-fused conv stack
    b = h3.shape[0]
    h_flat = h3.reshape(b, -1)               # free trailing-dims merge; fw1 pre-permuted
    return mlp_head(h_flat, prep, num_classes)


def init_params(key, input_length, num_classes=2):
    ks = jax.random.split(key, 10)

    def u(k, shape, fan_in):
        bound = 1.0 / np.sqrt(fan_in)
        return jax.random.uniform(k, shape, jnp.float32, -bound, bound)

    final_length = input_length // 8
    fin = 256 * final_length
    return {
        "cw1": u(ks[0], (KSIZE, 4, 64), 4 * KSIZE),
        "cb1": u(ks[1], (64,), 4 * KSIZE),
        "cw2": u(ks[2], (KSIZE, 64, 128), 64 * KSIZE),
        "cb2": u(ks[3], (128,), 64 * KSIZE),
        "cw3": u(ks[4], (KSIZE, 128, 256), 128 * KSIZE),
        "cb3": u(ks[5], (256,), 128 * KSIZE),
        "fw1": u(ks[6], (fin, 128), fin),
        "fb1": u(ks[7], (128,), fin),
        "fw2": u(ks[8], (128, num_classes), 128),
        "fb2": u(ks[9], (num_classes,), 128),
    }


# Pure-JAX reference (same math as the PyTorch module, via lax.conv).
def reference_forward(x, p):
    hp = lax.Precision.HIGHEST
    xc = jnp.transpose(x, (0, 2, 1))  # (B, C, L)

    def conv_block(xc, w, b):
        rhs = jnp.transpose(w, (2, 1, 0))  # (O, I, K)
        y = lax.conv_general_dilated(
            xc, rhs, window_strides=(1,), padding=[(2, 2)],
            dimension_numbers=("NCH", "OIH", "NCH"), precision=hp)
        y = jax.nn.relu(y + b[None, :, None])
        B, C, L = y.shape
        return jnp.max(y.reshape(B, C, L // 2, 2), axis=-1)

    h = conv_block(xc, p["cw1"], p["cb1"])
    h = conv_block(h, p["cw2"], p["cb2"])
    h = conv_block(h, p["cw3"], p["cb3"])
    h = h.reshape(h.shape[0], -1)
    h = jax.nn.relu(jnp.dot(h, p["fw1"], precision=hp) + p["fb1"])
    return jnp.dot(h, p["fw2"], precision=hp) + p["fb2"]


if __name__ == "__main__":
    B, L, NC = 2, 16, 2                      # small input_length=16 -> final_length = 2
    key = jax.random.PRNGKey(0)
    kx, kp = jax.random.split(key)
    x = jax.random.normal(kx, (B, L, 4), jnp.float32)
    params = init_params(kp, input_length=L, num_classes=NC)

    ref = jax.block_until_ready(reference_forward(x, params))
    fwd = jax.jit(dna_cnn_forward, static_argnames=("num_classes",))

    # f32 storage path: tight check against the HIGHEST-precision reference.
    prep32 = prepare_params(params, compute_dtype=jnp.float32)
    out32 = jax.block_until_ready(fwd(x, prep32, num_classes=NC))
    assert out32.shape == (B, NC) and out32.dtype == jnp.float32
    np.testing.assert_allclose(np.asarray(out32), np.asarray(ref),
                               rtol=1e-2, atol=1e-2)

    # bf16 storage / f32 accumulation path (default recommendation).
    prep16 = prepare_params(params, compute_dtype=jnp.bfloat16)
    out16 = jax.block_until_ready(fwd(x, prep16, num_classes=NC))
    assert out16.shape == (B, NC) and out16.dtype == jnp.float32
    np.testing.assert_allclose(np.asarray(out16), np.asarray(ref),
                               rtol=5e-2, atol=5e-2)   # bf16 storage tolerance

    print("KERNEL_OK")
</pallas_src>

<mosaic_0001>
module attributes {stable_mosaic.version = 11 : i64} {
  func.func @_conv_stack_kernel(%arg0: i32, %arg1: memref<1x16x4xf32, #tpu.memory_space<vmem>>, %arg2: memref<20x64xf32, #tpu.memory_space<vmem>>, %arg3: memref<1x64xf32, #tpu.memory_space<vmem>>, %arg4: memref<320x128xf32, #tpu.memory_space<vmem>>, %arg5: memref<1x128xf32, #tpu.memory_space<vmem>>, %arg6: memref<640x256xf32, #tpu.memory_space<vmem>>, %arg7: memref<1x256xf32, #tpu.memory_space<vmem>>, %arg8: memref<1x2x256xf32, #tpu.memory_space<vmem>>, %arg9: memref<1x20x4xf32, #tpu.memory_space<vmem>>, %arg10: memref<16x20xf32, #tpu.memory_space<vmem>>, %arg11: memref<1x12x64xf32, #tpu.memory_space<vmem>>, %arg12: memref<8x320xf32, #tpu.memory_space<vmem>>, %arg13: memref<1x8x128xf32, #tpu.memory_space<vmem>>, %arg14: memref<4x640xf32, #tpu.memory_space<vmem>>) attributes {dimension_semantics = [#tpu.dimension_semantics<parallel>], iteration_bounds = array<i64: 2>, scalar_prefetch = 0 : i64, scratch_operands = 6 : i64, tpu.core_type = #tpu.core_type<tc>, window_params = [{transform_indices = @transform_0, window_bounds = array<i64: 1, 16, 4>}, {pipeline_mode = #tpu.pipeline_mode<synchronous>, transform_indices = @transform_1, window_bounds = array<i64: 20, 64>}, {pipeline_mode = #tpu.pipeline_mode<synchronous>, transform_indices = @transform_2, window_bounds = array<i64: 1, 64>}, {pipeline_mode = #tpu.pipeline_mode<synchronous>, transform_indices = @transform_3, window_bounds = array<i64: 320, 128>}, {pipeline_mode = #tpu.pipeline_mode<synchronous>, transform_indices = @transform_4, window_bounds = array<i64: 1, 128>}, {pipeline_mode = #tpu.pipeline_mode<synchronous>, transform_indices = @transform_5, window_bounds = array<i64: 640, 256>}, {pipeline_mode = #tpu.pipeline_mode<synchronous>, transform_indices = @transform_6, window_bounds = array<i64: 1, 256>}, {transform_indices = @transform_7, window_bounds = array<i64: 1, 2, 256>}]} {
    %c0 = arith.constant 0 : index
    %c0_0 = arith.constant 0 : index
    %c0_1 = arith.constant 0 : index
    %0 = vector.load %arg1[%c0, %c0_0, %c0_1] : memref<1x16x4xf32, #tpu.memory_space<vmem>>, vector<1x16x4xf32>
    %cst = arith.constant 0.000000e+00 : f32
    %1 = vector.broadcast %cst : f32 to vector<1x2x4xf32>
    %c0_2 = arith.constant 0 : index
    %c0_3 = arith.constant 0 : index
    %c0_4 = arith.constant 0 : index
    %2 = vector.load %arg9[%c0_2, %c0_3, %c0_4] : memref<1x20x4xf32, #tpu.memory_space<vmem>>, vector<1x2x4xf32>
    tpu.vector_store %arg9[%c0_2, %c0_3, %c0_4], %1 {strides = array<i32>} : memref<1x20x4xf32, #tpu.memory_space<vmem>>, vector<1x2x4xf32>,
    %cst_5 = arith.constant 0.000000e+00 : f32
    %3 = vector.broadcast %cst_5 : f32 to vector<1x2x4xf32>
    %c0_6 = arith.constant 0 : index
    %c18 = arith.constant 18 : index
    %c0_7 = arith.constant 0 : index
    %4 = vector.load %arg9[%c0_6, %c18, %c0_7] : memref<1x20x4xf32, #tpu.memory_space<vmem>>, vector<1x2x4xf32>
    tpu.vector_store %arg9[%c0_6, %c18, %c0_7], %3 {strides = array<i32>} : memref<1x20x4xf32, #tpu.memory_space<vmem>>, vector<1x2x4xf32>,
    %c0_8 = arith.constant 0 : index
    %c2 = arith.constant 2 : index
    %c0_9 = arith.constant 0 : index
    %5 = vector.load %arg9[%c0_8, %c2, %c0_9] : memref<1x20x4xf32, #tpu.memory_space<vmem>>, vector<1x16x4xf32>
    tpu.vector_store %arg9[%c0_8, %c2, %c0_9], %0 {strides = array<i32>} : memref<1x20x4xf32, #tpu.memory_space<vmem>>, vector<1x16x4xf32>,
    %c0_10 = arith.constant 0 : index
    %c0_11 = arith.constant 0 : index
    %c0_12 = arith.constant 0 : index
    %6 = vector.load %arg9[%c0_10, %c0_11, %c0_12] : memref<1x20x4xf32, #tpu.memory_space<vmem>>, vector<1x16x4xf32>
    %c0_13 = arith.constant 0 : index
    %c1 = arith.constant 1 : index
    %c0_14 = arith.constant 0 : index
    %7 = vector.load %arg9[%c0_13, %c1, %c0_14] : memref<1x20x4xf32, #tpu.memory_space<vmem>>, vector<1x16x4xf32>
    %c0_15 = arith.constant 0 : index
    %c2_16 = arith.constant 2 : index
    %c0_17 = arith.constant 0 : index
    %8 = vector.load %arg9[%c0_15, %c2_16, %c0_17] : memref<1x20x4xf32, #tpu.memory_space<vmem>>, vector<1x16x4xf32>
    %c0_18 = arith.constant 0 : index
    %c3 = arith.constant 3 : index
    %c0_19 = arith.constant 0 : index
    %9 = vector.load %arg9[%c0_18, %c3, %c0_19] : memref<1x20x4xf32, #tpu.memory_space<vmem>>, vector<1x16x4xf32>
    %c0_20 = arith.constant 0 : index
    %c4 = arith.constant 4 : index
    %c0_21 = arith.constant 0 : index
    %10 = vector.load %arg9[%c0_20, %c4, %c0_21] : memref<1x20x4xf32, #tpu.memory_space<vmem>>, vector<1x16x4xf32>
    %11 = tpu.concatenate %6, %7, %8, %9, %10 in 2 : vector<1x16x4xf32>, vector<1x16x4xf32>, vector<1x16x4xf32>, vector<1x16x4xf32>, vector<1x16x4xf32> -> vector<1x16x20xf32>
    %12 = vector.shape_cast %11 : vector<1x16x20xf32> to vector<16x20xf32>
    %c0_22 = arith.constant 0 : index
    %c0_23 = arith.constant 0 : index
    %13 = vector.load %arg10[%c0_22, %c0_23] : memref<16x20xf32, #tpu.memory_space<vmem>>, vector<16x20xf32>
    tpu.vector_store %arg10[%c0_22, %c0_23], %12 {strides = array<i32>} : memref<16x20xf32, #tpu.memory_space<vmem>>, vector<16x20xf32>,
    %c0_24 = arith.constant 0 : index
    %c0_25 = arith.constant 0 : index
    %14 = vector.load %arg10[%c0_24, %c0_25] : memref<16x20xf32, #tpu.memory_space<vmem>>, vector<16x20xf32>
    %c0_26 = arith.constant 0 : index
    %c0_27 = arith.constant 0 : index
    %15 = vector.load %arg2[%c0_26, %c0_27] : memref<20x64xf32, #tpu.memory_space<vmem>>, vector<20x64xf32>
    %cst_28 = arith.constant dense<0.000000e+00> : vector<16x64xf32>
    %16 = tpu.matmul %14, %15, %cst_28 {dimension_numbers = #tpu.dot_dimension_numbers<[1], [0], [0], [1], [0, 0, 1, 1], [], []>} : vector<16x20xf32>, vector<20x64xf32>, vector<16x64xf32> -> vector<16x64xf32>
    %17 = vector.shape_cast %16 : vector<16x64xf32> to vector<8x2x64xf32>
    %cst_29 = arith.constant dense<0xFF800000> : vector<8x64xf32>
    %18 = vector.multi_reduction <maximumf>, %17, %cst_29 [1] : vector<8x2x64xf32> to vector<8x64xf32>
    %c0_30 = arith.constant 0 : index
    %c0_31 = arith.constant 0 : index
    %19 = vector.load %arg3[%c0_30, %c0_31] : memref<1x64xf32, #tpu.memory_space<vmem>>, vector<1x64xf32>
    %20 = vector.broadcast %19 : vector<1x64xf32> to vector<8x64xf32>
    %21 = arith.addf %18, %20 : vector<8x64xf32>
    %cst_32 = arith.constant 0.000000e+00 : f32
    %22 = vector.broadcast %cst_32 : f32 to vector<8x64xf32>
    %23 = arith.maximumf %21, %22 : vector<8x64xf32>
    %24 = vector.shape_cast %23 : vector<8x64xf32> to vector<1x8x64xf32>
    %cst_33 = arith.constant 0.000000e+00 : f32
    %25 = vector.broadcast %cst_33 : f32 to vector<1x2x64xf32>
    %c0_34 = arith.constant 0 : index
    %c0_35 = arith.constant 0 : index
    %c0_36 = arith.constant 0 : index
    %26 = vector.load %arg11[%c0_34, %c0_35, %c0_36] : memref<1x12x64xf32, #tpu.memory_space<vmem>>, vector<1x2x64xf32>
    tpu.vector_store %arg11[%c0_34, %c0_35, %c0_36], %25 {strides = array<i32>} : memref<1x12x64xf32, #tpu.memory_space<vmem>>, vector<1x2x64xf32>,
    %cst_37 = arith.constant 0.000000e+00 : f32
    %27 = vector.broadcast %cst_37 : f32 to vector<1x2x64xf32>
    %c0_38 = arith.constant 0 : index
    %c10 = arith.constant 10 : index
    %c0_39 = arith.constant 0 : index
    %28 = vector.load %arg11[%c0_38, %c10, %c0_39] : memref<1x12x64xf32, #tpu.memory_space<vmem>>, vector<1x2x64xf32>
    tpu.vector_store %arg11[%c0_38, %c10, %c0_39], %27 {strides = array<i32>} : memref<1x12x64xf32, #tpu.memory_space<vmem>>, vector<1x2x64xf32>,
    %c0_40 = arith.constant 0 : index
    %c2_41 = arith.constant 2 : index
    %c0_42 = arith.constant 0 : index
    %29 = vector.load %arg11[%c0_40, %c2_41, %c0_42] : memref<1x12x64xf32, #tpu.memory_space<vmem>>, vector<1x8x64xf32>
    tpu.vector_store %arg11[%c0_40, %c2_41, %c0_42], %24 {strides = array<i32>} : memref<1x12x64xf32, #tpu.memory_space<vmem>>, vector<1x8x64xf32>,
    %c0_43 = arith.constant 0 : index
    %c0_44 = arith.constant 0 : index
    %c0_45 = arith.constant 0 : index
    %30 = vector.load %arg11[%c0_43, %c0_44, %c0_45] : memref<1x12x64xf32, #tpu.memory_space<vmem>>, vector<1x8x64xf32>
    %c0_46 = arith.constant 0 : index
    %c1_47 = arith.constant 1 : index
    %c0_48 = arith.constant 0 : index
    %31 = vector.load %arg11[%c0_46, %c1_47, %c0_48] : memref<1x12x64xf32, #tpu.memory_space<vmem>>, vector<1x8x64xf32>
    %32 = tpu.concatenate %30, %31 in 2 : vector<1x8x64xf32>, vector<1x8x64xf32> -> vector<1x8x128xf32>
    %33 = vector.shape_cast %32 : vector<1x8x128xf32> to vector<8x128xf32>
    %c0_49 = arith.constant 0 : index
    %c0_50 = arith.constant 0 : index
    %34 = vector.load %arg12[%c0_49, %c0_50] : memref<8x320xf32, #tpu.memory_space<vmem>>, vector<8x128xf32>
    tpu.vector_store %arg12[%c0_49, %c0_50], %33 {strides = array<i32>} : memref<8x320xf32, #tpu.memory_space<vmem>>, vector<8x128xf32>,
    %c0_51 = arith.constant 0 : index
    %c2_52 = arith.constant 2 : index
    %c0_53 = arith.constant 0 : index
    %35 = vector.load %arg11[%c0_51, %c2_52, %c0_53] : memref<1x12x64xf32, #tpu.memory_space<vmem>>, vector<1x8x64xf32>
    %c0_54 = arith.constant 0 : index
    %c3_55 = arith.constant 3 : index
    %c0_56 = arith.constant 0 : index
    %36 = vector.load %arg11[%c0_54, %c3_55, %c0_56] : memref<1x12x64xf32, #tpu.memory_space<vmem>>, vector<1x8x64xf32>
    %37 = tpu.concatenate %35, %36 in 2 : vector<1x8x64xf32>, vector<1x8x64xf32> -> vector<1x8x128xf32>
    %38 = vector.shape_cast %37 : vector<1x8x128xf32> to vector<8x128xf32>
    %c0_57 = arith.constant 0 : index
    %c128 = arith.constant 128 : index
    %39 = vector.load %arg12[%c0_57, %c128] : memref<8x320xf32, #tpu.memory_space<vmem>>, vector<8x128xf32>
    tpu.vector_store %arg12[%c0_57, %c128], %38 {strides = array<i32>} : memref<8x320xf32, #tpu.memory_space<vmem>>, vector<8x128xf32>,
    %c0_58 = arith.constant 0 : index
    %c4_59 = arith.constant 4 : index
    %c0_60 = arith.constant 0 : index
    %40 = vector.load %arg11[%c0_58, %c4_59, %c0_60] : memref<1x12x64xf32, #tpu.memory_space<vmem>>, vector<1x8x64xf32>
    %41 = vector.shape_cast %40 : vector<1x8x64xf32> to vector<8x64xf32>
    %c0_61 = arith.constant 0 : index
    %c256 = arith.constant 256 : index
    %42 = vector.load %arg12[%c0_61, %c256] : memref<8x320xf32, #tpu.memory_space<vmem>>, vector<8x64xf32>
    tpu.vector_store %arg12[%c0_61, %c256], %41 {strides = array<i32>} : memref<8x320xf32, #tpu.memory_space<vmem>>, vector<8x64xf32>,
    %c0_62 = arith.constant 0 : index
    %c0_63 = arith.constant 0 : index
    %43 = vector.load %arg12[%c0_62, %c0_63] : memref<8x320xf32, #tpu.memory_space<vmem>>, vector<8x320xf32>
    %c0_64 = arith.constant 0 : index
    %c0_65 = arith.constant 0 : index
    %44 = vector.load %arg4[%c0_64, %c0_65] : memref<320x128xf32, #tpu.memory_space<vmem>>, vector<320x128xf32>
    %cst_66 = arith.constant dense<0.000000e+00> : vector<8x128xf32>
    %45 = tpu.matmul %43, %44, %cst_66 {dimension_numbers = #tpu.dot_dimension_numbers<[1], [0], [0], [1], [0, 0, 1, 1], [], []>} : vector<8x320xf32>, vector<320x128xf32>, vector<8x128xf32> -> vector<8x128xf32>
    %46 = vector.shape_cast %45 : vector<8x128xf32> to vector<4x2x128xf32>
    %cst_67 = arith.constant dense<0xFF800000> : vector<4x128xf32>
    %47 = vector.multi_reduction <maximumf>, %46, %cst_67 [1] : vector<4x2x128xf32> to vector<4x128xf32>
    %c0_68 = arith.constant 0 : index
    %c0_69 = arith.constant 0 : index
    %48 = vector.load %arg5[%c0_68, %c0_69] : memref<1x128xf32, #tpu.memory_space<vmem>>, vector<1x128xf32>
    %49 = vector.broadcast %48 : vector<1x128xf32> to vector<4x128xf32>
    %50 = arith.addf %47, %49 : vector<4x128xf32>
    %cst_70 = arith.constant 0.000000e+00 : f32
    %51 = vector.broadcast %cst_70 : f32 to vector<4x128xf32>
    %52 = arith.maximumf %50, %51 : vector<4x128xf32>
    %53 = vector.shape_cast %52 : vector<4x128xf32> to vector<1x4x128xf32>
    %cst_71 = arith.constant 0.000000e+00 : f32
    %54 = vector.broadcast %cst_71 : f32 to vector<1x2x128xf32>
    %c0_72 = arith.constant 0 : index
    %c0_73 = arith.constant 0 : index
    %c0_74 = arith.constant 0 : index
    %55 = vector.load %arg13[%c0_72, %c0_73, %c0_74] : memref<1x8x128xf32, #tpu.memory_space<vmem>>, vector<1x2x128xf32>
    tpu.vector_store %arg13[%c0_72, %c0_73, %c0_74], %54 {strides = array<i32>} : memref<1x8x128xf32, #tpu.memory_space<vmem>>, vector<1x2x128xf32>,
    %cst_75 = arith.constant 0.000000e+00 : f32
    %56 = vector.broadcast %cst_75 : f32 to vector<1x2x128xf32>
    %c0_76 = arith.constant 0 : index
    %c6 = arith.constant 6 : index
    %c0_77 = arith.constant 0 : index
    %57 = vector.load %arg13[%c0_76, %c6, %c0_77] : memref<1x8x128xf32, #tpu.memory_space<vmem>>, vector<1x2x128xf32>
    tpu.vector_store %arg13[%c0_76, %c6, %c0_77], %56 {strides = array<i32>} : memref<1x8x128xf32, #tpu.memory_space<vmem>>, vector<1x2x128xf32>,
    %c0_78 = arith.constant 0 : index
    %c2_79 = arith.constant 2 : index
    %c0_80 = arith.constant 0 : index
    %58 = vector.load %arg13[%c0_78, %c2_79, %c0_80] : memref<1x8x128xf32, #tpu.memory_space<vmem>>, vector<1x4x128xf32>
    tpu.vector_store %arg13[%c0_78, %c2_79, %c0_80], %53 {strides = array<i32>} : memref<1x8x128xf32, #tpu.memory_space<vmem>>, vector<1x4x128xf32>,
    %c0_81 = arith.constant 0 : index
    %c0_82 = arith.constant 0 : index
    %c0_83 = arith.constant 0 : index
    %59 = vector.load %arg13[%c0_81, %c0_82, %c0_83] : memref<1x8x128xf32, #tpu.memory_space<vmem>>, vector<1x4x128xf32>
    %60 = vector.shape_cast %59 : vector<1x4x128xf32> to vector<4x128xf32>
    %c0_84 = arith.constant 0 : index
    %c0_85 = arith.constant 0 : index
    %61 = vector.load %arg14[%c0_84, %c0_85] : memref<4x640xf32, #tpu.memory_space<vmem>>, vector<4x128xf32>
    tpu.vector_store %arg14[%c0_84, %c0_85], %60 {strides = array<i32>} : memref<4x640xf32, #tpu.memory_space<vmem>>, vector<4x128xf32>,
    %c0_86 = arith.constant 0 : index
    %c1_87 = arith.constant 1 : index
    %c0_88 = arith.constant 0 : index
    %62 = vector.load %arg13[%c0_86, %c1_87, %c0_88] : memref<1x8x128xf32, #tpu.memory_space<vmem>>, vector<1x4x128xf32>
    %63 = vector.shape_cast %62 : vector<1x4x128xf32> to vector<4x128xf32>
    %c0_89 = arith.constant 0 : index
    %c128_90 = arith.constant 128 : index
    %64 = vector.load %arg14[%c0_89, %c128_90] : memref<4x640xf32, #tpu.memory_space<vmem>>, vector<4x128xf32>
    tpu.vector_store %arg14[%c0_89, %c128_90], %63 {strides = array<i32>} : memref<4x640xf32, #tpu.memory_space<vmem>>, vector<4x128xf32>,
    %c0_91 = arith.constant 0 : index
    %c2_92 = arith.constant 2 : index
    %c0_93 = arith.constant 0 : index
    %65 = vector.load %arg13[%c0_91, %c2_92, %c0_93] : memref<1x8x128xf32, #tpu.memory_space<vmem>>, vector<1x4x128xf32>
    %66 = vector.shape_cast %65 : vector<1x4x128xf32> to vector<4x128xf32>
    %c0_94 = arith.constant 0 : index
    %c256_95 = arith.constant 256 : index
    %67 = vector.load %arg14[%c0_94, %c256_95] : memref<4x640xf32, #tpu.memory_space<vmem>>, vector<4x128xf32>
    tpu.vector_store %arg14[%c0_94, %c256_95], %66 {strides = array<i32>} : memref<4x640xf32, #tpu.memory_space<vmem>>, vector<4x128xf32>,
    %c0_96 = arith.constant 0 : index
    %c3_97 = arith.constant 3 : index
    %c0_98 = arith.constant 0 : index
    %68 = vector.load %arg13[%c0_96, %c3_97, %c0_98] : memref<1x8x128xf32, #tpu.memory_space<vmem>>, vector<1x4x128xf32>
    %69 = vector.shape_cast %68 : vector<1x4x128xf32> to vector<4x128xf32>
    %c0_99 = arith.constant 0 : index
    %c384 = arith.constant 384 : index
    %70 = vector.load %arg14[%c0_99, %c384] : memref<4x640xf32, #tpu.memory_space<vmem>>, vector<4x128xf32>
    tpu.vector_store %arg14[%c0_99, %c384], %69 {strides = array<i32>} : memref<4x640xf32, #tpu.memory_space<vmem>>, vector<4x128xf32>,
    %c0_100 = arith.constant 0 : index
    %c4_101 = arith.constant 4 : index
    %c0_102 = arith.constant 0 : index
    %71 = vector.load %arg13[%c0_100, %c4_101, %c0_102] : memref<1x8x128xf32, #tpu.memory_space<vmem>>, vector<1x4x128xf32>
    %72 = vector.shape_cast %71 : vector<1x4x128xf32> to vector<4x128xf32>
    %c0_103 = arith.constant 0 : index
    %c512 = arith.constant 512 : index
    %73 = vector.load %arg14[%c0_103, %c512] : memref<4x640xf32, #tpu.memory_space<vmem>>, vector<4x128xf32>
    tpu.vector_store %arg14[%c0_103, %c512], %72 {strides = array<i32>} : memref<4x640xf32, #tpu.memory_space<vmem>>, vector<4x128xf32>,
    %c0_104 = arith.constant 0 : index
    %c0_105 = arith.constant 0 : index
    %74 = vector.load %arg14[%c0_104, %c0_105] : memref<4x640xf32, #tpu.memory_space<vmem>>, vector<4x640xf32>
    %c0_106 = arith.constant 0 : index
    %c0_107 = arith.constant 0 : index
    %75 = vector.load %arg6[%c0_106, %c0_107] : memref<640x256xf32, #tpu.memory_space<vmem>>, vector<640x256xf32>
    %cst_108 = arith.constant dense<0.000000e+00> : vector<4x256xf32>
    %76 = tpu.matmul %74, %75, %cst_108 {dimension_numbers = #tpu.dot_dimension_numbers<[1], [0], [0], [1], [0, 0, 1, 1], [], []>} : vector<4x640xf32>, vector<640x256xf32>, vector<4x256xf32> -> vector<4x256xf32>
    %77 = vector.shape_cast %76 : vector<4x256xf32> to vector<2x2x256xf32>
    %cst_109 = arith.constant dense<0xFF800000> : vector<2x256xf32>
    %78 = vector.multi_reduction <maximumf>, %77, %cst_109 [1] : vector<2x2x256xf32> to vector<2x256xf32>
    %c0_110 = arith.constant 0 : index
    %c0_111 = arith.constant 0 : index
    %79 = vector.load %arg7[%c0_110, %c0_111] : memref<1x256xf32, #tpu.memory_space<vmem>>, vector<1x256xf32>
    %80 = vector.broadcast %79 : vector<1x256xf32> to vector<2x256xf32>
    %81 = arith.addf %78, %80 : vector<2x256xf32>
    %cst_112 = arith.constant 0.000000e+00 : f32
    %82 = vector.broadcast %cst_112 : f32 to vector<2x256xf32>
    %83 = arith.maximumf %81, %82 : vector<2x256xf32>
    %84 = vector.shape_cast %83 : vector<2x256xf32> to vector<1x2x256xf32>
    %c0_113 = arith.constant 0 : index
    %c0_114 = arith.constant 0 : index
    %c0_115 = arith.constant 0 : index
    %85 = vector.load %arg8[%c0_113, %c0_114, %c0_115] : memref<1x2x256xf32, #tpu.memory_space<vmem>>, vector<1x2x256xf32>
    tpu.vector_store %arg8[%c0_113, %c0_114, %c0_115], %84 {strides = array<i32>} : memref<1x2x256xf32, #tpu.memory_space<vmem>>, vector<1x2x256xf32>,
    return
  }
  func.func @transform_0(%arg0: i32) -> (i32, i32, i32) {
    %c0_i32 = arith.constant 0 : i32
    %c0_i32_0 = arith.constant 0 : i32
    %c0_i32_1 = arith.constant 0 : i32
    return %arg0, %c0_i32, %c0_i32_0 : i32, i32, i32
  }
  func.func @transform_1(%arg0: i32) -> (i32, i32) {
    %c0_i32 = arith.constant 0 : i32
    %c0_i32_0 = arith.constant 0 : i32
    %c0_i32_1 = arith.constant 0 : i32
    return %c0_i32, %c0_i32_0 : i32, i32
  }
  func.func @transform_2(%arg0: i32) -> (i32, i32) {
    %c0_i32 = arith.constant 0 : i32
    %c0_i32_0 = arith.constant 0 : i32
    %c0_i32_1 = arith.constant 0 : i32
    return %c0_i32, %c0_i32_0 : i32, i32
  }
  func.func @transform_3(%arg0: i32) -> (i32, i32) {
    %c0_i32 = arith.constant 0 : i32
    %c0_i32_0 = arith.constant 0 : i32
    %c0_i32_1 = arith.constant 0 : i32
    return %c0_i32, %c0_i32_0 : i32, i32
  }
  func.func @transform_4(%arg0: i32) -> (i32, i32) {
    %c0_i32 = arith.constant 0 : i32
    %c0_i32_0 = arith.constant 0 : i32
    %c0_i32_1 = arith.constant 0 : i32
    return %c0_i32, %c0_i32_0 : i32, i32
  }
  func.func @transform_5(%arg0: i32) -> (i32, i32) {
    %c0_i32 = arith.constant 0 : i32
    %c0_i32_0 = arith.constant 0 : i32
    %c0_i32_1 = arith.constant 0 : i32
    return %c0_i32, %c0_i32_0 : i32, i32
  }
  func.func @transform_6(%arg0: i32) -> (i32, i32) {
    %c0_i32 = arith.constant 0 : i32
    %c0_i32_0 = arith.constant 0 : i32
    %c0_i32_1 = arith.constant 0 : i32
    return %c0_i32, %c0_i32_0 : i32, i32
  }
  func.func @transform_7(%arg0: i32) -> (i32, i32, i32) {
    %c0_i32 = arith.constant 0 : i32
    %c0_i32_0 = arith.constant 0 : i32
    %c0_i32_1 = arith.constant 0 : i32
    return %arg0, %c0_i32, %c0_i32_0 : i32, i32, i32
  }
}

module attributes {stable_mosaic.version = 11 : i64} {
  func.func @_mlp_kernel(%arg0: i32, %arg1: i32, %arg2: memref<16x512xf32, #tpu.memory_space<vmem>>, %arg3: memref<512x128xf32, #tpu.memory_space<vmem>>, %arg4: memref<1x128xf32, #tpu.memory_space<vmem>>, %arg5: memref<128x128xf32, #tpu.memory_space<vmem>>, %arg6: memref<1x128xf32, #tpu.memory_space<vmem>>, %arg7: memref<16x128xf32, #tpu.memory_space<vmem>>, %arg8: memref<16x128xf32, #tpu.memory_space<vmem>>) attributes {dimension_semantics = [#tpu.dimension_semantics<parallel>, #tpu.dimension_semantics<arbitrary>], iteration_bounds = array<i64: 1, 1>, scalar_prefetch = 0 : i64, scratch_operands = 1 : i64, tpu.core_type = #tpu.core_type<tc>, window_params = [{transform_indices = @transform_0, window_bounds = array<i64: 16, 512>}, {transform_indices = @transform_1, window_bounds = array<i64: 512, 128>}, {pipeline_mode = #tpu.pipeline_mode<synchronous>, transform_indices = @transform_2, window_bounds = array<i64: 1, 128>}, {pipeline_mode = #tpu.pipeline_mode<synchronous>, transform_indices = @transform_3, window_bounds = array<i64: 128, 128>}, {pipeline_mode = #tpu.pipeline_mode<synchronous>, transform_indices = @transform_4, window_bounds = array<i64: 1, 128>}, {transform_indices = @transform_5, window_bounds = array<i64: 16, 128>}]} {
    %c0_i32 = arith.constant 0 : i32
    %0 = arith.cmpi eq, %arg1, %c0_i32 : i32
    %1 = arith.extui %0 : i1 to i32
    %c0_i32_0 = arith.constant 0 : i32
    %2 = arith.cmpi ne, %1, %c0_i32_0 : i32
    scf.if %2 {
      %cst_10 = arith.constant 0.000000e+00 : f32
      %12 = vector.broadcast %cst_10 : f32 to vector<16x128xf32>
      %c0_11 = arith.constant 0 : index
      %c0_12 = arith.constant 0 : index
      %13 = vector.load %arg8[%c0_11, %c0_12] : memref<16x128xf32, #tpu.memory_space<vmem>>, vector<16x128xf32>
      tpu.vector_store %arg8[%c0_11, %c0_12], %12 {strides = array<i32>} : memref<16x128xf32, #tpu.memory_space<vmem>>, vector<16x128xf32>,
    } else {
    }
    %c0 = arith.constant 0 : index
    %c0_1 = arith.constant 0 : index
    %3 = vector.load %arg8[%c0, %c0_1] : memref<16x128xf32, #tpu.memory_space<vmem>>, vector<16x128xf32>
    %c0_2 = arith.constant 0 : index
    %c0_3 = arith.constant 0 : index
    %4 = vector.load %arg2[%c0_2, %c0_3] : memref<16x512xf32, #tpu.memory_space<vmem>>, vector<16x512xf32>
    %c0_4 = arith.constant 0 : index
    %c0_5 = arith.constant 0 : index
    %5 = vector.load %arg3[%c0_4, %c0_5] : memref<512x128xf32, #tpu.memory_space<vmem>>, vector<512x128xf32>
    %cst = arith.constant dense<0.000000e+00> : vector<16x128xf32>
    %6 = tpu.matmul %4, %5, %cst {dimension_numbers = #tpu.dot_dimension_numbers<[1], [0], [0], [1], [0, 0, 1, 1], [], []>} : vector<16x512xf32>, vector<512x128xf32>, vector<16x128xf32> -> vector<16x128xf32>
    %7 = arith.addf %3, %6 : vector<16x128xf32>
    %c0_6 = arith.constant 0 : index
    %c0_7 = arith.constant 0 : index
    %8 = vector.load %arg8[%c0_6, %c0_7] : memref<16x128xf32, #tpu.memory_space<vmem>>, vector<16x128xf32>
    tpu.vector_store %arg8[%c0_6, %c0_7], %7 {strides = array<i32>} : memref<16x128xf32, #tpu.memory_space<vmem>>, vector<16x128xf32>,
    %c0_i32_8 = arith.constant 0 : i32
    %9 = arith.cmpi eq, %arg1, %c0_i32_8 : i32
    %10 = arith.extui %9 : i1 to i32
    %c0_i32_9 = arith.constant 0 : i32
    %11 = arith.cmpi ne, %10, %c0_i32_9 : i32
    scf.if %11 {
      %c0_10 = arith.constant 0 : index
      %c0_11 = arith.constant 0 : index
      %12 = vector.load %arg8[%c0_10, %c0_11] : memref<16x128xf32, #tpu.memory_space<vmem>>, vector<16x128xf32>
      %c0_12 = arith.constant 0 : index
      %c0_13 = arith.constant 0 : index
      %13 = vector.load %arg4[%c0_12, %c0_13] : memref<1x128xf32, #tpu.memory_space<vmem>>, vector<1x128xf32>
      %14 = vector.broadcast %13 : vector<1x128xf32> to vector<16x128xf32>
      %15 = arith.addf %12, %14 : vector<16x128xf32>
      %cst_14 = arith.constant 0.000000e+00 : f32
      %16 = vector.broadcast %cst_14 : f32 to vector<16x128xf32>
      %17 = arith.maximumf %15, %16 : vector<16x128xf32>
      %c0_15 = arith.constant 0 : index
      %c0_16 = arith.constant 0 : index
      %18 = vector.load %arg5[%c0_15, %c0_16] : memref<128x128xf32, #tpu.memory_space<vmem>>, vector<128x128xf32>
      %cst_17 = arith.constant dense<0.000000e+00> : vector<16x128xf32>
      %19 = tpu.matmul %17, %18, %cst_17 {dimension_numbers = #tpu.dot_dimension_numbers<[1], [0], [0], [1], [0, 0, 1, 1], [], []>} : vector<16x128xf32>, vector<128x128xf32>, vector<16x128xf32> -> vector<16x128xf32>
      %c0_18 = arith.constant 0 : index
      %c0_19 = arith.constant 0 : index
      %20 = vector.load %arg6[%c0_18, %c0_19] : memref<1x128xf32, #tpu.memory_space<vmem>>, vector<1x128xf32>
      %21 = vector.broadcast %20 : vector<1x128xf32> to vector<16x128xf32>
      %22 = arith.addf %19, %21 : vector<16x128xf32>
      %c0_20 = arith.constant 0 : index
      %c0_21 = arith.constant 0 : index
      %23 = vector.load %arg7[%c0_20, %c0_21] : memref<16x128xf32, #tpu.memory_space<vmem>>, vector<16x128xf32>
      tpu.vector_store %arg7[%c0_20, %c0_21], %22 {strides = array<i32>} : memref<16x128xf32, #tpu.memory_space<vmem>>, vector<16x128xf32>,
    } else {
    }
    return
  }
  func.func @transform_0(%arg0: i32, %arg1: i32) -> (i32, i32) {
    %c0_i32 = arith.constant 0 : i32
    return %arg0, %arg1 : i32, i32
  }
  func.func @transform_1(%arg0: i32, %arg1: i32) -> (i32, i32) {
    %c0_i32 = arith.constant 0 : i32
    %c0_i32_0 = arith.constant 0 : i32
    return %arg1, %c0_i32 : i32, i32
  }
  func.func @transform_2(%arg0: i32, %arg1: i32) -> (i32, i32) {
    %c0_i32 = arith.constant 0 : i32
    %c0_i32_0 = arith.constant 0 : i32
    %c0_i32_1 = arith.constant 0 : i32
    return %c0_i32, %c0_i32_0 : i32, i32
  }
  func.func @transform_3(%arg0: i32, %arg1: i32) -> (i32, i32) {
    %c0_i32 = arith.constant 0 : i32
    %c0_i32_0 = arith.constant 0 : i32
    %c0_i32_1 = arith.constant 0 : i32
    return %c0_i32, %c0_i32_0 : i32, i32
  }
  func.func @transform_4(%arg0: i32, %arg1: i32) -> (i32, i32) {
    %c0_i32 = arith.constant 0 : i32
    %c0_i32_0 = arith.constant 0 : i32
    %c0_i32_1 = arith.constant 0 : i32
    return %c0_i32, %c0_i32_0 : i32, i32
  }
  func.func @transform_5(%arg0: i32, %arg1: i32) -> (i32, i32) {
    %c0_i32 = arith.constant 0 : i32
    %c0_i32_0 = arith.constant 0 : i32
    return %arg0, %c0_i32 : i32, i32
  }
}

</mosaic_0001>

<llo_original>
// kernel: dna_cnn_forward.3
$region0: #{dna_cnn_forward.3}
  #allocation0 [shape = 'u32[]', space=smem, size = 0x4, offset = 0x4, fixed_abs, tag = 'smem constant byte address 0x4 - core index']
  #allocation1 [shape = 'u32[144,128]{1,0:T(1,128)}', space=vmem, size = 0x12000, scoped, tag = 'internal scratch']
  #allocation2 [shape = 'f32[16,128]{1,0:T(8,128)}', space=vmem, size = 0x2000, scoped, tag = 'scratch operand']
  %s0 = inlined_call_operand.vmem [shape: f32[16,512], index: 0, kind: input, shape index: {}]
  %s1 = inlined_call_operand.vmem [shape: f32[512,128], index: 1, kind: input, shape index: {}]
  %s2 = inlined_call_operand.vmem [shape: f32[1,128], index: 2, kind: input, shape index: {}]
  %s3 = inlined_call_operand.vmem [shape: f32[128,128], index: 3, kind: input, shape index: {}]
  %s4 = inlined_call_operand.vmem [shape: f32[1,128], index: 4, kind: input, shape index: {}]
  %s5 = inlined_call_operand.vmem [shape: f32[16,128], index: 5, kind: output, shape index: {}]
  %s6 = sld [smem:[#allocation0]]
  $region38: #{dna_cnn_forward.3} parent=0
    _
  %s8 = ssub.s32 1, %s6
  %s9 = scalar_select 0, %s8, %s6
  // Predicated region
  $region2: #{dna_cnn_forward.3} parent=0 // pred_check
    _
  $region3: #{dna_cnn_forward.3} parent=0 // pred_check_branch
    %11 = sbr.rel (0) target = $region5
  $region4: #{dna_cnn_forward.3} parent=0 // pred_region
    _
  $region5: #{dna_cnn_forward.3} parent=0 // pred_fallthru
    _
  // Predicated region
  $region6: #{dna_cnn_forward.3} parent=0 // pred_check
    _
  $region7: #{dna_cnn_forward.3} parent=0 // pred_check_branch
    %13 = sbr.rel (0) target = $region9
  $region8: #{dna_cnn_forward.3} parent=0 // pred_region
    _
  $region9: #{dna_cnn_forward.3} parent=0 // pred_fallthru
    _
  // Predicated region
  $region10: #{dna_cnn_forward.3} parent=0 // pred_check
    _
  $region11: #{dna_cnn_forward.3} parent=0 // pred_check_branch
    %15 = sbr.rel (0) target = $region13
  $region12: #{dna_cnn_forward.3} parent=0 // pred_region
    _
  $region13: #{dna_cnn_forward.3} parent=0 // pred_fallthru
    _
  // Predicated region
  $region14: #{dna_cnn_forward.3} parent=0 // pred_check
    _
  $region15: #{dna_cnn_forward.3} parent=0 // pred_check_branch
    %17 = sbr.rel (0) target = $region17
  $region16: #{dna_cnn_forward.3} parent=0 // pred_region
    _
  $region17: #{dna_cnn_forward.3} parent=0 // pred_fallthru
    _
  // Predicated region
  $region18: #{dna_cnn_forward.3} parent=0 // pred_check
    _
  $region19: #{dna_cnn_forward.3} parent=0 // pred_check_branch
    %19 = sbr.rel (0) target = $region21
  $region20: #{dna_cnn_forward.3} parent=0 // pred_region
    _
  $region21: #{dna_cnn_forward.3} parent=0 // pred_fallthru
    _
  %p20 = scmp.eq.s32.totalorder 0, 0
  // Predicated region
  $region22: #{dna_cnn_forward.3} parent=0 // pred_check
    %p21 = pneg %p20
  $region23: #{dna_cnn_forward.3} parent=0 // pred_check_branch
    %23 = sbr.rel (%p21) target = $region25
  $region24: #{dna_cnn_forward.3} parent=0 // pred_region
    %24 = vst [vmem:[#allocation2] sm:$0xff] 0.0
    %25 = vst [vmem:[#allocation2 + $0x8] sm:$0xff] 0.0
  $region25: #{dna_cnn_forward.3} parent=0 // pred_fallthru
    _
  %v26 = vld [vmem:[#allocation2] sm:$0xff]
  %v27 = vld [vmem:[#allocation2 + $0x8] sm:$0xff]
  %v28 = vld [vmem:[%s0] sm:$0xff]
  %v29 = vld [vmem:[%s0 + $0x8] sm:$0xff]
  %v30 = vld [vmem:[%s0 + $0x10] sm:$0xff]
  %v31 = vld [vmem:[%s0 + $0x18] sm:$0xff]
  %v32 = vld [vmem:[%s0 + $0x20] sm:$0xff]
  %v33 = vld [vmem:[%s0 + $0x28] sm:$0xff]
  %v34 = vld [vmem:[%s0 + $0x30] sm:$0xff]
  %v35 = vld [vmem:[%s0 + $0x38] sm:$0xff]
  %v36 = vld [vmem:[%s1] sm:$0xff]
  %v37 = vld [vmem:[%s1 + $0x8] sm:$0xff]
  %v38 = vld [vmem:[%s1 + $0x10] sm:$0xff]
  %v39 = vld [vmem:[%s1 + $0x18] sm:$0xff]
  %v40 = vld [vmem:[%s1 + $0x20] sm:$0xff]
  %v41 = vld [vmem:[%s1 + $0x28] sm:$0xff]
  %v42 = vld [vmem:[%s1 + $0x30] sm:$0xff]
  %v43 = vld [vmem:[%s1 + $0x38] sm:$0xff]
  %v44 = vld [vmem:[%s1 + $0x40] sm:$0xff]
  %v45 = vld [vmem:[%s1 + $0x48] sm:$0xff]
  %v46 = vld [vmem:[%s1 + $0x50] sm:$0xff]
  %v47 = vld [vmem:[%s1 + $0x58] sm:$0xff]
  %v48 = vld [vmem:[%s1 + $0x60] sm:$0xff]
  %v49 = vld [vmem:[%s1 + $0x68] sm:$0xff]
  %v50 = vld [vmem:[%s1 + $0x70] sm:$0xff]
  %v51 = vld [vmem:[%s1 + $0x78] sm:$0xff]
  %v52 = vld [vmem:[%s1 + $0x80] sm:$0xff]
  %v53 = vld [vmem:[%s1 + $0x88] sm:$0xff]
  %v54 = vld [vmem:[%s1 + $0x90] sm:$0xff]
  %v55 = vld [vmem:[%s1 + $0x98] sm:$0xff]
  %v56 = vld [vmem:[%s1 + $0xa0] sm:$0xff]
  %v57 = vld [vmem:[%s1 + $0xa8] sm:$0xff]
  %v58 = vld [vmem:[%s1 + $0xb0] sm:$0xff]
  %v59 = vld [vmem:[%s1 + $0xb8] sm:$0xff]
  %v60 = vld [vmem:[%s1 + $0xc0] sm:$0xff]
  %v61 = vld [vmem:[%s1 + $0xc8] sm:$0xff]
  %v62 = vld [vmem:[%s1 + $0xd0] sm:$0xff]
  %v63 = vld [vmem:[%s1 + $0xd8] sm:$0xff]
  %v64 = vld [vmem:[%s1 + $0xe0] sm:$0xff]
  %v65 = vld [vmem:[%s1 + $0xe8] sm:$0xff]
  %v66 = vld [vmem:[%s1 + $0xf0] sm:$0xff]
  %v67 = vld [vmem:[%s1 + $0xf8] sm:$0xff]
  %v68 = vld [vmem:[%s1 + $0x100] sm:$0xff]
  %v69 = vld [vmem:[%s1 + $0x108] sm:$0xff]
  %v70 = vld [vmem:[%s1 + $0x110] sm:$0xff]
  %v71 = vld [vmem:[%s1 + $0x118] sm:$0xff]
  %v72 = vld [vmem:[%s1 + $0x120] sm:$0xff]
  %v73 = vld [vmem:[%s1 + $0x128] sm:$0xff]
  %v74 = vld [vmem:[%s1 + $0x130] sm:$0xff]
  %v75 = vld [vmem:[%s1 + $0x138] sm:$0xff]
  %v76 = vld [vmem:[%s1 + $0x140] sm:$0xff]
  %v77 = vld [vmem:[%s1 + $0x148] sm:$0xff]
  %v78 = vld [vmem:[%s1 + $0x150] sm:$0xff]
  %v79 = vld [vmem:[%s1 + $0x158] sm:$0xff]
  %v80 = vld [vmem:[%s1 + $0x160] sm:$0xff]
  %v81 = vld [vmem:[%s1 + $0x168] sm:$0xff]
  %v82 = vld [vmem:[%s1 + $0x170] sm:$0xff]
  %v83 = vld [vmem:[%s1 + $0x178] sm:$0xff]
  %v84 = vld [vmem:[%s1 + $0x180] sm:$0xff]
  %v85 = vld [vmem:[%s1 + $0x188] sm:$0xff]
  %v86 = vld [vmem:[%s1 + $0x190] sm:$0xff]
  %v87 = vld [vmem:[%s1 + $0x198] sm:$0xff]
  %v88 = vld [vmem:[%s1 + $0x1a0] sm:$0xff]
  %v89 = vld [vmem:[%s1 + $0x1a8] sm:$0xff]
  %v90 = vld [vmem:[%s1 + $0x1b0] sm:$0xff]
  %v91 = vld [vmem:[%s1 + $0x1b8] sm:$0xff]
  %v92 = vld [vmem:[%s1 + $0x1c0] sm:$0xff]
  %v93 = vld [vmem:[%s1 + $0x1c8] sm:$0xff]
  %v94 = vld [vmem:[%s1 + $0x1d0] sm:$0xff]
  %v95 = vld [vmem:[%s1 + $0x1d8] sm:$0xff]
  %v96 = vld [vmem:[%s1 + $0x1e0] sm:$0xff]
  %v97 = vld [vmem:[%s1 + $0x1e8] sm:$0xff]
  %v98 = vld [vmem:[%s1 + $0x1f0] sm:$0xff]
  %v99 = vld [vmem:[%s1 + $0x1f8] sm:$0xff]
  %100 = vmatprep.subr.mxu0 0.0
  %101 = vmatpush1.msra.mxu0 %v36
  %102 = vmatprep.subr.mxu0 0.0
  %103 = vmatpush1.msra.mxu0 %v37
  %104 = vmatprep.subr.mxu0 0.0
  %105 = vmatpush1.msra.mxu0 %v38
  %106 = vmatprep.subr.mxu0 0.0
  %107 = vmatpush1.msra.mxu0 %v39
  %108 = vmatprep.subr.mxu0 0.0
  %109 = vmatpush1.msra.mxu0 %v40
  %110 = vmatprep.subr.mxu0 0.0
  %111 = vmatpush1.msra.mxu0 %v41
  %112 = vmatprep.subr.mxu0 0.0
  %113 = vmatpush1.msra.mxu0 %v42
  %114 = vmatprep.subr.mxu0 0.0
  %115 = vmatpush1.msra.mxu0 %v43
  %116 = vmatprep.subr.mxu0 0.0
  %117 = vmatpush1.msra.mxu0 %v44
  %118 = vmatprep.subr.mxu0 0.0
  %119 = vmatpush1.msra.mxu0 %v45
  %120 = vmatprep.subr.mxu0 0.0
  %121 = vmatpush1.msra.mxu0 %v46
  %122 = vmatprep.subr.mxu0 0.0
  %123 = vmatpush1.msra.mxu0 %v47
  %124 = vmatprep.subr.mxu0 0.0
  %125 = vmatpush1.msra.mxu0 %v48
  %126 = vmatprep.subr.mxu0 0.0
  %127 = vmatpush1.msra.mxu0 %v49
  %128 = vmatprep.subr.mxu0 0.0
  %129 = vmatpush1.msra.mxu0 %v50
  %130 = vmatprep.subr.mxu0 0.0
  %131 = vmatpush1.msra.mxu0 %v51
  %132 = vmatprep.subr.mxu0 0.0
  %133 = vmatpush1.msra.mxu0 %v52
  %134 = vmatprep.subr.mxu0 0.0
  %135 = vmatpush1.msra.mxu0 %v53
  %136 = vmatprep.subr.mxu0 0.0
  %137 = vmatpush1.msra.mxu0 %v54
  %138 = vmatprep.subr.mxu0 0.0
  %139 = vmatpush1.msra.mxu0 %v55
  %140 = vmatprep.subr.mxu0 0.0
  %141 = vmatpush1.msra.mxu0 %v56
  %142 = vmatprep.subr.mxu0 0.0
  %143 = vmatpush1.msra.mxu0 %v57
  %144 = vmatprep.subr.mxu0 0.0
  %145 = vmatpush1.msra.mxu0 %v58
  %146 = vmatprep.subr.mxu0 0.0
  %147 = vmatpush1.msra.mxu0 %v59
  %148 = vmatprep.subr.mxu0 0.0
  %149 = vmatpush1.msra.mxu0 %v60
  %150 = vmatprep.subr.mxu0 0.0
  %151 = vmatpush1.msra.mxu0 %v61
  %152 = vmatprep.subr.mxu0 0.0
  %153 = vmatpush1.msra.mxu0 %v62
  %154 = vmatprep.subr.mxu0 0.0
  %155 = vmatpush1.msra.mxu0 %v63
  %156 = vmatprep.subr.mxu0 0.0
  %157 = vmatpush1.msra.mxu0 %v64
  %158 = vmatprep.subr.mxu0 0.0
  %159 = vmatpush1.msra.mxu0 %v65
  %160 = vmatprep.subr.mxu0 0.0
  %161 = vmatpush1.msra.mxu0 %v66
  %162 = vmatprep.subr.mxu0 0.0
  %163 = vmatpush1.msra.mxu0 %v67
  %164 = vmatprep.mubr.f32.mxu0 %v29
  %165 = vmatmul.mubr.f32.gmra.mrb[0].mxu0 %v28
  %v166 = vpop.f32.mrb[0].mxu0
  %v167 = vadd.f32 0.0, %v166
  %v168 = vpop.f32.mrb[0].mxu0
  %169 = vmatprep.mubr.f32.mxu0 %v33
  %170 = vmatmul.mubr.f32.gmra.mrb[0].mxu0 %v32
  %v171 = vpop.f32.mrb[0].mxu0
  %v172 = vadd.f32 0.0, %v171
  %v173 = vpop.f32.mrb[0].mxu0
  %174 = vdwg.mxu0
  %175 = vmatprep.subr.mxu0 0.0
  %176 = vmatpush1.msra.mxu0 %v68
  %177 = vmatprep.subr.mxu0 0.0
  %178 = vmatpush1.msra.mxu0 %v69
  %179 = vmatprep.subr.mxu0 0.0
  %180 = vmatpush1.msra.mxu0 %v70
  %181 = vmatprep.subr.mxu0 0.0
  %182 = vmatpush1.msra.mxu0 %v71
  %183 = vmatprep.subr.mxu0 0.0
  %184 = vmatpush1.msra.mxu0 %v72
  %185 = vmatprep.subr.mxu0 0.0
  %186 = vmatpush1.msra.mxu0 %v73
  %187 = vmatprep.subr.mxu0 0.0
  %188 = vmatpush1.msra.mxu0 %v74
  %189 = vmatprep.subr.mxu0 0.0
  %190 = vmatpush1.msra.mxu0 %v75
  %191 = vmatprep.subr.mxu0 0.0
  %192 = vmatpush1.msra.mxu0 %v76
  %193 = vmatprep.subr.mxu0 0.0
  %194 = vmatpush1.msra.mxu0 %v77
  %195 = vmatprep.subr.mxu0 0.0
  %196 = vmatpush1.msra.mxu0 %v78
  %197 = vmatprep.subr.mxu0 0.0
  %198 = vmatpush1.msra.mxu0 %v79
  %199 = vmatprep.subr.mxu0 0.0
  %200 = vmatpush1.msra.mxu0 %v80
  %201 = vmatprep.subr.mxu0 0.0
  %202 = vmatpush1.msra.mxu0 %v81
  %203 = vmatprep.subr.mxu0 0.0
  %204 = vmatpush1.msra.mxu0 %v82
  %205 = vmatprep.subr.mxu0 0.0
  %206 = vmatpush1.msra.mxu0 %v83
  %207 = vmatprep.subr.mxu0 0.0
  %208 = vmatpush1.msra.mxu0 %v84
  %209 = vmatprep.subr.mxu0 0.0
  %210 = vmatpush1.msra.mxu0 %v85
  %211 = vmatprep.subr.mxu0 0.0
  %212 = vmatpush1.msra.mxu0 %v86
  %213 = vmatprep.subr.mxu0 0.0
  %214 = vmatpush1.msra.mxu0 %v87
  %215 = vmatprep.subr.mxu0 0.0
  %216 = vmatpush1.msra.mxu0 %v88
  %217 = vmatprep.subr.mxu0 0.0
  %218 = vmatpush1.msra.mxu0 %v89
  %219 = vmatprep.subr.mxu0 0.0
  %220 = vmatpush1.msra.mxu0 %v90
  %221 = vmatprep.subr.mxu0 0.0
  %222 = vmatpush1.msra.mxu0 %v91
  %223 = vmatprep.subr.mxu0 0.0
  %224 = vmatpush1.msra.mxu0 %v92
  %225 = vmatprep.subr.mxu0 0.0
  %226 = vmatpush1.msra.mxu0 %v93
  %227 = vmatprep.subr.mxu0 0.0
  %228 = vmatpush1.msra.mxu0 %v94
  %229 = vmatprep.subr.mxu0 0.0
  %230 = vmatpush1.msra.mxu0 %v95
  %231 = vmatprep.subr.mxu0 0.0
  %232 = vmatpush1.msra.mxu0 %v96
  %233 = vmatprep.subr.mxu0 0.0
  %234 = vmatpush1.msra.mxu0 %v97
  %235 = vmatprep.subr.mxu0 0.0
  %236 = vmatpush1.msra.mxu0 %v98
  %237 = vmatprep.subr.mxu0 0.0
  %238 = vmatpush1.msra.mxu0 %v99
  %239 = vmatprep.mubr.f32.mxu0 %v31
  %240 = vmatmul.mubr.f32.gmra.mrb[0].mxu0 %v30
  %v241 = vpop.f32.mrb[0].mxu0
  %v242 = vadd.f32 %v167, %v241
  %v243 = vpop.f32.mrb[0].mxu0
  %244 = vmatprep.mubr.f32.mxu0 %v35
  %245 = vmatmul.mubr.f32.gmra.mrb[0].mxu0 %v34
  %v246 = vpop.f32.mrb[0].mxu0
  %v247 = vadd.f32 %v172, %v246
  %v248 = vpop.f32.mrb[0].mxu0
  %249 = vdwg.mxu0
  %v250 = vadd.f32 %v26, %v242
  %v251 = vadd.f32 %v27, %v247
  %252 = vst [vmem:[#allocation2] sm:$0xff] %v250
  %253 = vst [vmem:[#allocation2 + $0x8] sm:$0xff] %v251
  // Predicated region
  $region26: #{dna_cnn_forward.3} parent=0 // pred_check
    %p254 = pneg %p20
  $region27: #{dna_cnn_forward.3} parent=0 // pred_check_branch
    %256 = sbr.rel (%p254) target = $region29
  $region28: #{dna_cnn_forward.3} parent=0 // pred_region
    %v257 = vld [vmem:[#allocation2] sm:$0xff]
    %v258 = vld [vmem:[#allocation2 + $0x8] sm:$0xff]
    %v259 = vld [vmem:[%s2] sm:$0x1]
    %v261 = vlaneseq
    %v262 = vshrl.u32 %v261, 7
    %v263 = vsub.s32 0, %v262
    %v264 = vrot.slane %v259, %v263
    %v266 = vadd.f32 %v257, %v264
    %v267 = vadd.f32 %v258, %v264
    %v268 = vmax.f32 %v266, 0.0
    %v269 = vmax.f32 %v267, 0.0
    %v270 = vld [vmem:[%s3] sm:$0xff]
    %v271 = vld [vmem:[%s3 + $0x8] sm:$0xff]
    %v272 = vld [vmem:[%s3 + $0x10] sm:$0xff]
    %v273 = vld [vmem:[%s3 + $0x18] sm:$0xff]
    %v274 = vld [vmem:[%s3 + $0x20] sm:$0xff]
    %v275 = vld [vmem:[%s3 + $0x28] sm:$0xff]
    %v276 = vld [vmem:[%s3 + $0x30] sm:$0xff]
    %v277 = vld [vmem:[%s3 + $0x38] sm:$0xff]
    %v278 = vld [vmem:[%s3 + $0x40] sm:$0xff]
    %v279 = vld [vmem:[%s3 + $0x48] sm:$0xff]
    %v280 = vld [vmem:[%s3 + $0x50] sm:$0xff]
    %v281 = vld [vmem:[%s3 + $0x58] sm:$0xff]
    %v282 = vld [vmem:[%s3 + $0x60] sm:$0xff]
    %v283 = vld [vmem:[%s3 + $0x68] sm:$0xff]
    %v284 = vld [vmem:[%s3 + $0x70] sm:$0xff]
    %v285 = vld [vmem:[%s3 + $0x78] sm:$0xff]
    %v286 = vld [vmem:[%s4] sm:$0x1]
    %v288 = vlaneseq
    %v289 = vshrl.u32 %v288, 7
    %v290 = vsub.s32 0, %v289
    %v291 = vrot.slane %v286, %v290
    %293 = vmatprep.subr.mxu0 0.0
    %294 = vmatpush1.msra.mxu0 %v270
    %295 = vmatprep.subr.mxu0 0.0
    %296 = vmatpush1.msra.mxu0 %v271
    %297 = vmatprep.subr.mxu0 0.0
    %298 = vmatpush1.msra.mxu0 %v272
    %299 = vmatprep.subr.mxu0 0.0
    %300 = vmatpush1.msra.mxu0 %v273
    %301 = vmatprep.subr.mxu0 0.0
    %302 = vmatpush1.msra.mxu0 %v274
    %303 = vmatprep.subr.mxu0 0.0
    %304 = vmatpush1.msra.mxu0 %v275
    %305 = vmatprep.subr.mxu0 0.0
    %306 = vmatpush1.msra.mxu0 %v276
    %307 = vmatprep.subr.mxu0 0.0
    %308 = vmatpush1.msra.mxu0 %v277
    %309 = vmatprep.subr.mxu0 0.0
    %310 = vmatpush1.msra.mxu0 %v278
    %311 = vmatprep.subr.mxu0 0.0
    %312 = vmatpush1.msra.mxu0 %v279
    %313 = vmatprep.subr.mxu0 0.0
    %314 = vmatpush1.msra.mxu0 %v280
    %315 = vmatprep.subr.mxu0 0.0
    %316 = vmatpush1.msra.mxu0 %v281
    %317 = vmatprep.subr.mxu0 0.0
    %318 = vmatpush1.msra.mxu0 %v282
    %319 = vmatprep.subr.mxu0 0.0
    %320 = vmatpush1.msra.mxu0 %v283
    %321 = vmatprep.subr.mxu0 0.0
    %322 = vmatpush1.msra.mxu0 %v284
    %323 = vmatprep.subr.mxu0 0.0
    %324 = vmatpush1.msra.mxu0 %v285
    %325 = vmatprep.subr.mxu0 0.0
    %326 = vmatpush1.msra.mxu0 0.0
    %327 = vmatprep.subr.mxu0 0.0
    %328 = vmatpush1.msra.mxu0 0.0
    %329 = vmatprep.subr.mxu0 0.0
    %330 = vmatpush1.msra.mxu0 0.0
    %331 = vmatprep.subr.mxu0 0.0
    %332 = vmatpush1.msra.mxu0 0.0
    %333 = vmatprep.subr.mxu0 0.0
    %334 = vmatpush1.msra.mxu0 0.0
    %335 = vmatprep.subr.mxu0 0.0
    %336 = vmatpush1.msra.mxu0 0.0
    %337 = vmatprep.subr.mxu0 0.0
    %338 = vmatpush1.msra.mxu0 0.0
    %339 = vmatprep.subr.mxu0 0.0
    %340 = vmatpush1.msra.mxu0 0.0
    %341 = vmatprep.subr.mxu0 0.0
    %342 = vmatpush1.msra.mxu0 0.0
    %343 = vmatprep.subr.mxu0 0.0
    %344 = vmatpush1.msra.mxu0 0.0
    %345 = vmatprep.subr.mxu0 0.0
    %346 = vmatpush1.msra.mxu0 0.0
    %347 = vmatprep.subr.mxu0 0.0
    %348 = vmatpush1.msra.mxu0 0.0
    %349 = vmatprep.subr.mxu0 0.0
    %350 = vmatpush1.msra.mxu0 0.0
    %351 = vmatprep.subr.mxu0 0.0
    %352 = vmatpush1.msra.mxu0 0.0
    %353 = vmatprep.subr.mxu0 0.0
    %354 = vmatpush1.msra.mxu0 0.0
    %355 = vmatprep.subr.mxu0 0.0
    %356 = vmatpush1.msra.mxu0 0.0
    %357 = vmatprep.mubr.f32.mxu0 0.0
    %358 = vmatmul.mubr.f32.gmra.mrb[0].mxu0 %v268
    %v359 = vpop.f32.mrb[0].mxu0
    %v360 = vadd.f32 %v291, %v359
    %v361 = vpop.f32.mrb[0].mxu0
    %362 = vmatprep.mubr.f32.mxu0 0.0
    %363 = vmatmul.mubr.f32.gmra.mrb[0].mxu0 %v269
    %v364 = vpop.f32.mrb[0].mxu0
    %v365 = vadd.f32 %v291, %v364
    %v366 = vpop.f32.mrb[0].mxu0
    %367 = vdwg.mxu0
    %368 = vst [vmem:[%s5] sm:$0xff] %v360
    %369 = vst [vmem:[%s5 + $0x8] sm:$0xff] %v365
  $region29: #{dna_cnn_forward.3} parent=0 // pred_fallthru
    _
  // Predicated region
  $region30: #{dna_cnn_forward.3} parent=0 // pred_check
    _
  $region31: #{dna_cnn_forward.3} parent=0 // pred_check_branch
    %371 = sbr.rel (0) target = $region33
  $region32: #{dna_cnn_forward.3} parent=0 // pred_region
    _
  $region33: #{dna_cnn_forward.3} parent=0 // pred_fallthru
    _
  // Predicated region
  $region34: #{dna_cnn_forward.3} parent=0 // pred_check
    _
  $region35: #{dna_cnn_forward.3} parent=0 // pred_check_branch
    %373 = sbr.rel (0) target = $region37
  $region36: #{dna_cnn_forward.3} parent=0 // pred_region
    _
  $region37: #{dna_cnn_forward.3} parent=0 // pred_fallthru
    _

// kernel: dna_cnn_forward.2
$region0: #{dna_cnn_forward.2}
  #allocation0 [shape = 'u32[]', space=smem, size = 0x4, offset = 0x4, fixed_abs, tag = 'smem constant byte address 0x4 - core index']
  #allocation1 [shape = 'u32[144,128]{1,0:T(1,128)}', space=vmem, size = 0x12000, scoped, tag = 'internal scratch']
  #allocation2 [shape = 'f32[1,20,4]{2,1,0:T(8,128)}', space=vmem, size = 0x3000, scoped, tag = 'scratch operand']
  #allocation3 [shape = 'f32[16,20]{1,0:T(8,128)}', space=vmem, size = 0x2000, scoped, tag = 'scratch operand']
  #allocation4 [shape = 'f32[1,12,64]{2,1,0:T(8,128)}', space=vmem, size = 0x2000, scoped, tag = 'scratch operand']
  #allocation5 [shape = 'f32[8,320]{1,0:T(8,128)}', space=vmem, size = 0x3000, scoped, tag = 'scratch operand']
  #allocation6 [shape = 'f32[1,8,128]{2,1,0:T(8,128)}', space=vmem, size = 0x1000, scoped, tag = 'scratch operand']
  #allocation7 [shape = 'f32[4,640]{1,0:T(4,128)}', space=vmem, size = 0x2800, scoped, tag = 'scratch operand']
  %s0 = inlined_call_operand.vmem [shape: f32[2,16,4], index: 0, kind: input, shape index: {}]
  %s1 = inlined_call_operand.vmem [shape: f32[20,64], index: 1, kind: input, shape index: {}]
  %s2 = inlined_call_operand.vmem [shape: f32[1,64], index: 2, kind: input, shape index: {}]
  %s3 = inlined_call_operand.hbm [shape: f32[320,128], index: 3, kind: input, shape index: {}]
  %s4 = inlined_call_operand.vmem [shape: f32[1,128], index: 4, kind: input, shape index: {}]
  %s5 = inlined_call_operand.hbm [shape: f32[640,256], index: 5, kind: input, shape index: {}]
  %s6 = inlined_call_operand.vmem [shape: f32[1,256], index: 6, kind: input, shape index: {}]
  %s7 = inlined_call_operand.vmem [shape: f32[2,2,256], index: 7, kind: output, shape index: {}]
  %s8 = sld [smem:[#allocation0]]
  $region69: #{dna_cnn_forward.2} parent=0
    _
  %s10 = ssub.s32 1, %s8
  %s11 = scalar_select 0, %s10, %s8
  $region1: #{dna_cnn_forward.2} parent=0
    #allocation8 [shape = 'u8[163840]{0}', space=vmem, size = 0x28000, scoped, tag = 'input window, operand 3, single buffered']
    #allocation9 [shape = 's32[2]{0}', space=sflag, size = 0x8, scoped, tag = 'scoped memory for dna_cnn_forward.2']
    #allocation10 [shape = 'u8[655360]{0}', space=vmem, size = 0xa0000, scoped, tag = 'input window, operand 5, single buffered']
    #allocation11 [shape = 's32[1]{0}', space=sflag, size = 0x4, scoped, tag = 'scoped memory for dna_cnn_forward.2']
    %12 = vsyncpa [#allocation9], 0
    %13 = vsyncpa [#allocation11], 0
    loop: start=0, step=1, limit=4
    $region2: #{dna_cnn_forward.2} parent=1 // loop_pre_header
      _
    $region3: #{dna_cnn_forward.2} parent=1 // loop_header
      %s15 = sphi 0, %s19
      %p16 = scmp.ge.s32.totalorder %s15, 4
      %s25 = sphi 0, %s27
      %s28 = sphi 0, %s25
      %s29 = sphi 0, %s28
      %s45 = sphi 0, %s29
      %s49 = sphi 0, %s49
      %s51 = sphi 0, %s49
      %s52 = sphi 0, %s51
      %s66 = sphi 0, %s52
      %s70 = sphi 0, %s70
      %s72 = sphi 0, %s70
      %s73 = sphi 0, %s72
      %s87 = sphi 0, %s73
      %s91 = sphi 0, %s91
      %s93 = sphi 0, %s91
      %s94 = sphi 0, %s93
      %s108 = sphi 0, %s94
      %s112 = sphi 0, %s112
      %s114 = sphi 0, %s112
      %s115 = sphi 0, %s114
      %s129 = sphi 0, %s115
      %s133 = sphi 0, %s133
      %s135 = sphi 0, %s133
      %s136 = sphi 0, %s135
      %s150 = sphi 0, %s136
      %s154 = sphi 0, %s154
      %s156 = sphi 0, %s154
      %s157 = sphi 0, %s156
      %s171 = sphi 0, %s157
      %s177 = sphi 0, %s179
      %s180 = sphi 0, %s177
      %s181 = sphi 0, %s180
      %s197 = sphi 0, %s181
    $region4: #{dna_cnn_forward.2} parent=1 // loop_header_branch
      %18 = sbr.rel (%p16) target = $region8
    $region5: #{dna_cnn_forward.2} parent=1 // loop_body
      %s20 = ssub.s32 %s15, 1
      %s21 = ssub.s32 %s15, 2
      %s22 = sadd.s32 %s15, 1
      %s23 = ssub.s32 %s15, %s22
      %p24 = scmp.eq.s32.totalorder %s23, 0
      %s26 = sadd.s32 %s25, 1
      %s27 = scalar_select %p24, %s25, %s26
      %p30 = pneg %p24
      %p31 = scmp.eq.s32.totalorder %s15, 1
      %p32 = por %p30, %p31
      %p33 = scmp.ne.s32.totalorder %s25, %s28
      %p34 = scmp.eq.s32.totalorder %s15, 0
      %p35 = por %p33, %p34
      %p36 = scmp.ne.s32.totalorder %s25, %s28
      %p37 = scmp.eq.s32.totalorder %s20, 1
      %p38 = por %p36, %p37
      %p39 = scmp.ne.s32.totalorder %s28, %s29
      %p40 = scmp.eq.s32.totalorder %s20, 0
      %p41 = por %p39, %p40
      %p42 = scmp.ne.s32.totalorder %s28, %s29
      %p43 = scmp.eq.s32.totalorder %s21, 1
      %p44 = por %p42, %p43
      %p46 = scmp.ne.s32.totalorder %s29, %s45
      %p47 = scmp.eq.s32.totalorder %s21, 0
      %p48 = por %p46, %p47
      %s50 = sadd.s32 %s49, 1
      %p53 = scmp.eq.s32.totalorder %s15, 1
      %p54 = scmp.ne.s32.totalorder %s49, %s51
      %p55 = scmp.eq.s32.totalorder %s15, 0
      %p56 = por %p54, %p55
      %p57 = scmp.ne.s32.totalorder %s49, %s51
      %p58 = scmp.eq.s32.totalorder %s20, 1
      %p59 = por %p57, %p58
      %p60 = scmp.ne.s32.totalorder %s51, %s52
      %p61 = scmp.eq.s32.totalorder %s20, 0
      %p62 = por %p60, %p61
      %p63 = scmp.ne.s32.totalorder %s51, %s52
      %p64 = scmp.eq.s32.totalorder %s21, 1
      %p65 = por %p63, %p64
      %p67 = scmp.ne.s32.totalorder %s52, %s66
      %p68 = scmp.eq.s32.totalorder %s21, 0
      %p69 = por %p67, %p68
      %s71 = sadd.s32 %s70, 1
      %p74 = scmp.eq.s32.totalorder %s15, 1
      %p75 = scmp.ne.s32.totalorder %s70, %s72
      %p76 = scmp.eq.s32.totalorder %s15, 0
      %p77 = por %p75, %p76
      %p78 = scmp.ne.s32.totalorder %s70, %s72
      %p79 = scmp.eq.s32.totalorder %s20, 1
      %p80 = por %p78, %p79
      %p81 = scmp.ne.s32.totalorder %s72, %s73
      %p82 = scmp.eq.s32.totalorder %s20, 0
      %p83 = por %p81, %p82
      %p84 = scmp.ne.s32.totalorder %s72, %s73
      %p85 = scmp.eq.s32.totalorder %s21, 1
      %p86 = por %p84, %p85
      %p88 = scmp.ne.s32.totalorder %s73, %s87
      %p89 = scmp.eq.s32.totalorder %s21, 0
      %p90 = por %p88, %p89
      %s92 = sadd.s32 %s91, 1
      %p95 = scmp.eq.s32.totalorder %s15, 1
      %p96 = scmp.ne.s32.totalorder %s91, %s93
      %p97 = scmp.eq.s32.totalorder %s15, 0
      %p98 = por %p96, %p97
      %p99 = scmp.ne.s32.totalorder %s91, %s93
      %p100 = scmp.eq.s32.totalorder %s20, 1
      %p101 = por %p99, %p100
      %p102 = scmp.ne.s32.totalorder %s93, %s94
      %p103 = scmp.eq.s32.totalorder %s20, 0
      %p104 = por %p102, %p103
      %p105 = scmp.ne.s32.totalorder %s93, %s94
      %p106 = scmp.eq.s32.totalorder %s21, 1
      %p107 = por %p105, %p106
      %p109 = scmp.ne.s32.totalorder %s94, %s108
      %p110 = scmp.eq.s32.totalorder %s21, 0
      %p111 = por %p109, %p110
      %s113 = sadd.s32 %s112, 1
      %p116 = scmp.eq.s32.totalorder %s15, 1
      %p117 = scmp.ne.s32.totalorder %s112, %s114
      %p118 = scmp.eq.s32.totalorder %s15, 0
      %p119 = por %p117, %p118
      %p120 = scmp.ne.s32.totalorder %s112, %s114
      %p121 = scmp.eq.s32.totalorder %s20, 1
      %p122 = por %p120, %p121
      %p123 = scmp.ne.s32.totalorder %s114, %s115
      %p124 = scmp.eq.s32.totalorder %s20, 0
      %p125 = por %p123, %p124
      %p126 = scmp.ne.s32.totalorder %s114, %s115
      %p127 = scmp.eq.s32.totalorder %s21, 1
      %p128 = por %p126, %p127
      %p130 = scmp.ne.s32.totalorder %s115, %s129
      %p131 = scmp.eq.s32.totalorder %s21, 0
      %p132 = por %p130, %p131
      %s134 = sadd.s32 %s133, 1
      %p137 = scmp.eq.s32.totalorder %s15, 1
      %p138 = scmp.ne.s32.totalorder %s133, %s135
      %p139 = scmp.eq.s32.totalorder %s15, 0
      %p140 = por %p138, %p139
      %p141 = scmp.ne.s32.totalorder %s133, %s135
      %p142 = scmp.eq.s32.totalorder %s20, 1
      %p143 = por %p141, %p142
      %p144 = scmp.ne.s32.totalorder %s135, %s136
      %p145 = scmp.eq.s32.totalorder %s20, 0
      %p146 = por %p144, %p145
      %p147 = scmp.ne.s32.totalorder %s135, %s136
      %p148 = scmp.eq.s32.totalorder %s21, 1
      %p149 = por %p147, %p148
      %p151 = scmp.ne.s32.totalorder %s136, %s150
      %p152 = scmp.eq.s32.totalorder %s21, 0
      %p153 = por %p151, %p152
      %s155 = sadd.s32 %s154, 1
      %p158 = scmp.eq.s32.totalorder %s15, 1
      %p159 = scmp.ne.s32.totalorder %s154, %s156
      %p160 = scmp.eq.s32.totalorder %s15, 0
      %p161 = por %p159, %p160
      %p162 = scmp.ne.s32.totalorder %s154, %s156
      %p163 = scmp.eq.s32.totalorder %s20, 1
      %p164 = por %p162, %p163
      %p165 = scmp.ne.s32.totalorder %s156, %s157
      %p166 = scmp.eq.s32.totalorder %s20, 0
      %p167 = por %p165, %p166
      %p168 = scmp.ne.s32.totalorder %s156, %s157
      %p169 = scmp.eq.s32.totalorder %s21, 1
      %p170 = por %p168, %p169
      %p172 = scmp.ne.s32.totalorder %s157, %s171
      %p173 = scmp.eq.s32.totalorder %s21, 0
      %p174 = por %p172, %p173
      %s175 = ssub.s32 %s15, %s22
      %p176 = scmp.eq.s32.totalorder %s175, 0
      %s178 = sadd.s32 %s177, 1
      %s179 = scalar_select %p176, %s177, %s178
      %p182 = pneg %p176
      %p183 = scmp.eq.s32.totalorder %s15, 1
      %p184 = por %p182, %p183
      %p185 = scmp.ne.s32.totalorder %s177, %s180
      %p186 = scmp.eq.s32.totalorder %s15, 0
      %p187 = por %p185, %p186
      %p188 = scmp.ne.s32.totalorder %s177, %s180
      %p189 = scmp.eq.s32.totalorder %s20, 1
      %p190 = por %p188, %p189
      %p191 = scmp.ne.s32.totalorder %s180, %s181
      %p192 = scmp.eq.s32.totalorder %s20, 0
      %p193 = por %p191, %p192
      %p194 = scmp.ne.s32.totalorder %s180, %s181
      %p195 = scmp.eq.s32.totalorder %s21, 1
      %p196 = por %p194, %p195
      %p198 = scmp.ne.s32.totalorder %s181, %s197
      %p199 = scmp.eq.s32.totalorder %s21, 0
      %p200 = por %p198, %p199
      %p201 = scmp.le.s32.totalorder 1, %s15
      %p202 = scmp.lt.s32.totalorder %s15, 3
      %p203 = pnand %p201, %p202
      %p204 = pneg %p203
      // Predicated region
      $region9: #{dna_cnn_forward.2} parent=5 // pred_check
        _
      $region10: #{dna_cnn_forward.2} parent=5 // pred_check_branch
        %206 = sbr.rel (%p203) target = $region12
      $region11: #{dna_cnn_forward.2} parent=5 // pred_region
        %s207 = ssub.s32 %s15, 1
        // Predicated region
        $region13: #{dna_cnn_forward.2} parent=11 // pred_check
          %p208 = pneg %p62
        $region14: #{dna_cnn_forward.2} parent=11 // pred_check_branch
          %210 = sbr.rel (%p208) target = $region16
        $region15: #{dna_cnn_forward.2} parent=11 // pred_region
          _
        $region16: #{dna_cnn_forward.2} parent=11 // pred_fallthru
          _
        // Predicated region
        $region17: #{dna_cnn_forward.2} parent=11 // pred_check
          %p211 = pneg %p83
        $region18: #{dna_cnn_forward.2} parent=11 // pred_check_branch
          %213 = sbr.rel (%p211) target = $region20
        $region19: #{dna_cnn_forward.2} parent=11 // pred_region
          _
        $region20: #{dna_cnn_forward.2} parent=11 // pred_fallthru
          _
        // Predicated region
        $region21: #{dna_cnn_forward.2} parent=11 // pred_check
          %p214 = pneg %p104
        $region22: #{dna_cnn_forward.2} parent=11 // pred_check_branch
          %216 = sbr.rel (%p214) target = $region24
        $region23: #{dna_cnn_forward.2} parent=11 // pred_region
          %s218 = ssub.s32 5120, 5120
          %219 = vsyncadd [#allocation9], %s218
          %s220 = sshll.u32 [#allocation8], 4
          %s221 = int_to_ptr.vmem [resolvable:$true] %s220
          %226 = dma.hbm_to_vmem [thread:$0]  %s3, 5120, %s221, [#allocation9], 128, 128, 8
        $region24: #{dna_cnn_forward.2} parent=11 // pred_fallthru
          _
        // Predicated region
        $region25: #{dna_cnn_forward.2} parent=11 // pred_check
          %p227 = pneg %p125
        $region26: #{dna_cnn_forward.2} parent=11 // pred_check_branch
          %229 = sbr.rel (%p227) target = $region28
        $region27: #{dna_cnn_forward.2} parent=11 // pred_region
          _
        $region28: #{dna_cnn_forward.2} parent=11 // pred_fallthru
          _
        // Predicated region
        $region29: #{dna_cnn_forward.2} parent=11 // pred_check
          %p230 = pneg %p146
        $region30: #{dna_cnn_forward.2} parent=11 // pred_check_branch
          %232 = sbr.rel (%p230) target = $region32
        $region31: #{dna_cnn_forward.2} parent=11 // pred_region
          %s234 = ssub.s32 20480, 20480
          %235 = vsyncadd [#allocation11], %s234
          %s236 = sshll.u32 [#allocation10], 4
          %s237 = int_to_ptr.vmem [resolvable:$true] %s236
          %242 = dma.hbm_to_vmem [thread:$0]  %s5, 20480, %s237, [#allocation11], 256, 256, 16
        $region32: #{dna_cnn_forward.2} parent=11 // pred_fallthru
          _
        // Predicated region
        $region33: #{dna_cnn_forward.2} parent=11 // pred_check
          %p243 = pneg %p167
        $region34: #{dna_cnn_forward.2} parent=11 // pred_check_branch
          %245 = sbr.rel (%p243) target = $region36
        $region35: #{dna_cnn_forward.2} parent=11 // pred_region
          _
        $region36: #{dna_cnn_forward.2} parent=11 // pred_fallthru
          _
      $region12: #{dna_cnn_forward.2} parent=5 // pred_fallthru
        _
      %p246 = scmp.lt.s32.totalorder %s15, 2
      // Predicated region
      $region37: #{dna_cnn_forward.2} parent=5 // pred_check
        %p247 = pneg %p246
      $region38: #{dna_cnn_forward.2} parent=5 // pred_check_branch
        %249 = sbr.rel (%p247) target = $region40
      $region39: #{dna_cnn_forward.2} parent=5 // pred_region
        // Predicated region
        $region41: #{dna_cnn_forward.2} parent=39 // pred_check
          %p250 = pneg %p35
        $region42: #{dna_cnn_forward.2} parent=39 // pred_check_branch
          %252 = sbr.rel (%p250) target = $region44
        $region43: #{dna_cnn_forward.2} parent=39 // pred_region
          %p253 = scmp.lt.s32.totalorder %s15, 1
          %s254 = scalar_select %p253, %s15, 1
          %s255 = smul.addr %s254, 2
          %s256 = smul.addr %s255, 8
          %s257 = scalar_lea.vmem %s0, %s256
        $region44: #{dna_cnn_forward.2} parent=39 // pred_fallthru
          _
      $region40: #{dna_cnn_forward.2} parent=5 // pred_fallthru
        _
      %p258 = scmp.le.s32.totalorder 1, %s15
      %p259 = scmp.lt.s32.totalorder %s15, 3
      %p260 = pnand %p258, %p259
      %p261 = pneg %p260
      // Predicated region
      $region45: #{dna_cnn_forward.2} parent=5 // pred_check
        _
      $region46: #{dna_cnn_forward.2} parent=5 // pred_check_branch
        %263 = sbr.rel (%p260) target = $region48
      $region47: #{dna_cnn_forward.2} parent=5 // pred_region
        %s264 = ssub.s32 %s15, 1
        // Predicated region
        $region49: #{dna_cnn_forward.2} parent=47 // pred_check
          %p265 = pneg %p104
        $region50: #{dna_cnn_forward.2} parent=47 // pred_check_branch
          %267 = sbr.rel (%p265) target = $region52
        $region51: #{dna_cnn_forward.2} parent=47 // pred_region
          %268 = dma.done [#allocation9], 5120
        $region52: #{dna_cnn_forward.2} parent=47 // pred_fallthru
          _
        // Predicated region
        $region53: #{dna_cnn_forward.2} parent=47 // pred_check
          %p269 = pneg %p146
        $region54: #{dna_cnn_forward.2} parent=47 // pred_check_branch
          %271 = sbr.rel (%p269) target = $region56
        $region55: #{dna_cnn_forward.2} parent=47 // pred_region
          %272 = dma.done [#allocation11], 20480
        $region56: #{dna_cnn_forward.2} parent=47 // pred_fallthru
          _
        %p273 = scmp.lt.s32.totalorder %s20, 1
        %s274 = scalar_select %p273, %s20, 1
        %s275 = smul.addr %s274, 2
        %s276 = smul.addr %s275, 8
        %s277 = scalar_lea.vmem %s0, %s276
        %p278 = pneg %p41
        %p279 = pneg %p38
        %p280 = pneg %p62
        %p281 = pneg %p59
        %p282 = pneg %p83
        %p283 = pneg %p80
        %p284 = pneg %p104
        %p285 = pneg %p101
        %p286 = pneg %p125
        %p287 = pneg %p122
        %p288 = pneg %p146
        %p289 = pneg %p143
        %p290 = pneg %p167
        %p291 = pneg %p164
        %p292 = pneg %p193
        %p293 = pneg %p190
        %p294 = scmp.lt.s32.totalorder %s20, 1
        %s295 = scalar_select %p294, %s20, 1
        %s296 = smul.addr %s295, 2
        %s297 = smul.addr %s296, 2
        %s298 = scalar_lea.vmem %s7, %s297
        %p299 = scmp.lt.s32.totalorder %s20, 1
        %s300 = scalar_select %p299, %s20, 1
        %s301 = smul.addr %s300, 2
        %s302 = smul.addr %s301, 8
        %s303 = scalar_lea.vmem %s0, %s302
        %p304 = scmp.lt.s32.totalorder %s20, 1
        %s305 = scalar_select %p304, %s20, 1
        %s306 = smul.addr %s305, 2
        %s307 = smul.addr %s306, 2
        %s308 = scalar_lea.vmem %s7, %s307
        %v309 = vld [vmem:[%s303] sm:$0xff]
        %v310 = vld [vmem:[%s303 + $0x8] sm:$0xff]
        %vm311 = vcmask 25600
        %312 = vst.msk [vmem:[#allocation2] sm:$0x3] %vm311, 0.0
        %313 = vst.msk [vmem:[#allocation2 + $0x12] sm:$0x3] %vm311, 0.0
        %vm314 = vcmask 31744
        %315 = vst.msk [vmem:[#allocation2 + $0x2] sm:$0xff] %vm314, %v309
        %316 = vst.msk [vmem:[#allocation2 + $0xa] sm:$0xff] %vm314, %v310
        %v317 = vld [vmem:[#allocation2] sm:$0xff]
        %v318 = vld [vmem:[#allocation2 + $0x8] sm:$0xff]
        %v319 = vld [vmem:[#allocation2 + $0x1] sm:$0xff]
        %v320 = vld [vmem:[#allocation2 + $0x9] sm:$0xff]
        %v321 = vld [vmem:[#allocation2 + $0x2] sm:$0xff]
        %v322 = vld [vmem:[#allocation2 + $0xa] sm:$0xff]
        %v323 = vld [vmem:[#allocation2 + $0x3] sm:$0xff]
        %v324 = vld [vmem:[#allocation2 + $0xb] sm:$0xff]
        %v325 = vld [vmem:[#allocation2 + $0x4] sm:$0xff]
        %v326 = vld [vmem:[#allocation2 + $0xc] sm:$0xff]
        %329 = vrot.lane.b32.xlu0 %v319, 4
        %v330 = vpop.permute.xlu0 %329
        %331 = vrot.lane.b32.xlu0 %v320, 4
        %v332 = vpop.permute.xlu0 %331
        %337 = vrot.lane.b32.xlu0 %v321, 8
        %v338 = vpop.permute.xlu0 %337
        %339 = vrot.lane.b32.xlu0 %v322, 8
        %v340 = vpop.permute.xlu0 %339
        %345 = vrot.lane.b32.xlu0 %v323, 12
        %v346 = vpop.permute.xlu0 %345
        %347 = vrot.lane.b32.xlu0 %v324, 12
        %v348 = vpop.permute.xlu0 %347
        %353 = vrot.lane.b32.xlu0 %v325, 16
        %v354 = vpop.permute.xlu0 %353
        %355 = vrot.lane.b32.xlu0 %v326, 16
        %v356 = vpop.permute.xlu0 %355
        %v359 = vsel %vm314, %v317, %v330
        %v360 = vsel %vm314, %v318, %v332
        %vm361 = vcmask 64512
        %v362 = vsel %vm361, %v359, %v338
        %v363 = vsel %vm361, %v360, %v340
        %vm364 = vcmask 97280
        %v365 = vsel %vm364, %v362, %v346
        %v366 = vsel %vm364, %v363, %v348
        %vm367 = vcmask 130048
        %v368 = vsel %vm367, %v365, %v354
        %v369 = vsel %vm367, %v366, %v356
        %vm370 = vcmask 162816
        %371 = vst.msk [vmem:[#allocation3] sm:$0xff] %vm370, %v368
        %372 = vst.msk [vmem:[#allocation3 + $0x8] sm:$0xff] %vm370, %v369
        %v373 = vld [vmem:[#allocation3] sm:$0xff]
        %v374 = vld [vmem:[#allocation3 + $0x8] sm:$0xff]
        %v375 = vld [vmem:[%s1] sm:$0xff]
        %v376 = vld [vmem:[%s1 + $0x8] sm:$0xff]
        %v377 = vld [vmem:[%s1 + $0x10] sm:$0xf]
        %v379 = vsel %vm370, %v373, 0
        %v382 = vsel %vm370, %v374, 0
        %vm384 = vcmask 1043456
        %v386 = vsel %vm384, %v377, 0
        %388 = vmatprep.subr.mxu0 0.0
        %389 = vmatpush1.msra.mxu0 %v375
        %390 = vmatprep.subr.mxu0 0.0
        %391 = vmatpush1.msra.mxu0 %v376
        %392 = vmatprep.subr.mxu0 0.0
        %393 = vmatpush1.msra.mxu0 %v386
        %394 = vmatprep.subr.mxu0 0.0
        %395 = vmatpush1.msra.mxu0 0.0
        %396 = vmatprep.subr.mxu0 0.0
        %397 = vmatpush1.msra.mxu0 0.0
        %398 = vmatprep.subr.mxu0 0.0
        %399 = vmatpush1.msra.mxu0 0.0
        %400 = vmatprep.subr.mxu0 0.0
        %401 = vmatpush1.msra.mxu0 0.0
        %402 = vmatprep.subr.mxu0 0.0
        %403 = vmatpush1.msra.mxu0 0.0
        %404 = vmatprep.subr.mxu0 0.0
        %405 = vmatpush1.msra.mxu0 0.0
        %406 = vmatprep.subr.mxu0 0.0
        %407 = vmatpush1.msra.mxu0 0.0
        %408 = vmatprep.subr.mxu0 0.0
        %409 = vmatpush1.msra.mxu0 0.0
        %410 = vmatprep.subr.mxu0 0.0
        %411 = vmatpush1.msra.mxu0 0.0
        %412 = vmatprep.subr.mxu0 0.0
        %413 = vmatpush1.msra.mxu0 0.0
        %414 = vmatprep.subr.mxu0 0.0
        %415 = vmatpush1.msra.mxu0 0.0
        %416 = vmatprep.subr.mxu0 0.0
        %417 = vmatpush1.msra.mxu0 0.0
        %418 = vmatprep.subr.mxu0 0.0
        %419 = vmatpush1.msra.mxu0 0.0
        %420 = vmatprep.subr.mxu0 0.0
        %421 = vmatpush1.msra.mxu0 0.0
        %422 = vmatprep.subr.mxu0 0.0
        %423 = vmatpush1.msra.mxu0 0.0
        %424 = vmatprep.subr.mxu0 0.0
        %425 = vmatpush1.msra.mxu0 0.0
        %426 = vmatprep.subr.mxu0 0.0
        %427 = vmatpush1.msra.mxu0 0.0
        %428 = vmatprep.subr.mxu0 0.0
        %429 = vmatpush1.msra.mxu0 0.0
        %430 = vmatprep.subr.mxu0 0.0
        %431 = vmatpush1.msra.mxu0 0.0
        %432 = vmatprep.subr.mxu0 0.0
        %433 = vmatpush1.msra.mxu0 0.0
        %434 = vmatprep.subr.mxu0 0.0
        %435 = vmatpush1.msra.mxu0 0.0
        %436 = vmatprep.subr.mxu0 0.0
        %437 = vmatpush1.msra.mxu0 0.0
        %438 = vmatprep.subr.mxu0 0.0
        %439 = vmatpush1.msra.mxu0 0.0
        %440 = vmatprep.subr.mxu0 0.0
        %441 = vmatpush1.msra.mxu0 0.0
        %442 = vmatprep.subr.mxu0 0.0
        %443 = vmatpush1.msra.mxu0 0.0
        %444 = vmatprep.subr.mxu0 0.0
        %445 = vmatpush1.msra.mxu0 0.0
        %446 = vmatprep.subr.mxu0 0.0
        %447 = vmatpush1.msra.mxu0 0.0
        %448 = vmatprep.subr.mxu0 0.0
        %449 = vmatpush1.msra.mxu0 0.0
        %450 = vmatprep.subr.mxu0 0.0
        %451 = vmatpush1.msra.mxu0 0.0
        %452 = vmatprep.mubr.f32.mxu0 0.0
        %453 = vmatmul.mubr.f32.gmra.mrb[0].mxu0 %v379
        %v454 = vpop.f32.mrb[0].mxu0
        %v455 = vadd.f32 0.0, %v454
        %v456 = vpop.f32.mrb[0].mxu0
        %457 = vmatprep.mubr.f32.mxu0 0.0
        %458 = vmatmul.mubr.f32.gmra.mrb[0].mxu0 %v382
        %v459 = vpop.f32.mrb[0].mxu0
        %v460 = vadd.f32 0.0, %v459
        %v461 = vpop.f32.mrb[0].mxu0
        %462 = vdwg.mxu0
        %v465 = vcombine.high %v455, %v455
        %v467 = vunpack.c.l.s4 1983009808
        %v468 = vunpack.c.0.s8 %v467
        %v469 = vlaneseq
        %v470 = vshrl.u32 %v469, 7
        %v471 = vsub.s32 %v468, %v470
        %v472 = vrot.slane %v455, %v471
        %v474 = vunpack.c.l.s4 1983009808
        %v475 = vunpack.c.0.s8 %v474
        %v476 = vlaneseq
        %v477 = vshrl.u32 %v476, 7
        %v478 = vsub.s32 %v475, %v477
        %v479 = vrot.slane %v465, %v478
        %v480 = vcombine.high %v472, %v472
        %v481 = vcombine.high %v479, %v479
        %v482 = vcombine.high %v460, %v460
        %v484 = vunpack.c.l.s4 1983009808
        %v485 = vunpack.c.0.s8 %v484
        %v486 = vlaneseq
        %v487 = vshrl.u32 %v486, 7
        %v488 = vsub.s32 %v485, %v487
        %v489 = vrot.slane %v460, %v488
        %v491 = vunpack.c.l.s4 1983009808
        %v492 = vunpack.c.0.s8 %v491
        %v493 = vlaneseq
        %v494 = vshrl.u32 %v493, 7
        %v495 = vsub.s32 %v492, %v494
        %v496 = vrot.slane %v482, %v495
        %v497 = vcombine.high %v489, %v489
        %v498 = vcombine.high %v496, %v496
        %vm507 = vcmask 517120
        %v508 = vsel %vm507, %v472, -inf
        %v509 = vrot.slane %v508, 4
        %v510 = vmax.f32 %v508, %v509
        %v511 = vrot.slane %v510, 2
        %v512 = vmax.f32 %v510, %v511
        %v513 = vrot.slane %v512, 1
        %v514 = vmax.f32 %v512, %v513
        %v515 = vsel %vm507, %v480, -inf
        %v516 = vrot.slane %v515, 4
        %v517 = vmax.f32 %v515, %v516
        %v518 = vrot.slane %v517, 2
        %v519 = vmax.f32 %v517, %v518
        %v520 = vrot.slane %v519, 1
        %v521 = vmax.f32 %v519, %v520
        %v522 = vsel %vm507, %v479, -inf
        %v523 = vrot.slane %v522, 4
        %v524 = vmax.f32 %v522, %v523
        %v525 = vrot.slane %v524, 2
        %v526 = vmax.f32 %v524, %v525
        %v527 = vrot.slane %v526, 1
        %v528 = vmax.f32 %v526, %v527
        %v529 = vsel %vm507, %v481, -inf
        %v530 = vrot.slane %v529, 4
        %v531 = vmax.f32 %v529, %v530
        %v532 = vrot.slane %v531, 2
        %v533 = vmax.f32 %v531, %v532
        %v534 = vrot.slane %v533, 1
        %v535 = vmax.f32 %v533, %v534
        %v536 = vsel %vm507, %v489, -inf
        %v537 = vrot.slane %v536, 4
        %v538 = vmax.f32 %v536, %v537
        %v539 = vrot.slane %v538, 2
        %v540 = vmax.f32 %v538, %v539
        %v541 = vrot.slane %v540, 1
        %v542 = vmax.f32 %v540, %v541
        %v543 = vsel %vm507, %v497, -inf
        %v544 = vrot.slane %v543, 4
        %v545 = vmax.f32 %v543, %v544
        %v546 = vrot.slane %v545, 2
        %v547 = vmax.f32 %v545, %v546
        %v548 = vrot.slane %v547, 1
        %v549 = vmax.f32 %v547, %v548
        %v550 = vsel %vm507, %v496, -inf
        %v551 = vrot.slane %v550, 4
        %v552 = vmax.f32 %v550, %v551
        %v553 = vrot.slane %v552, 2
        %v554 = vmax.f32 %v552, %v553
        %v555 = vrot.slane %v554, 1
        %v556 = vmax.f32 %v554, %v555
        %v557 = vsel %vm507, %v498, -inf
        %v558 = vrot.slane %v557, 4
        %v559 = vmax.f32 %v557, %v558
        %v560 = vrot.slane %v559, 2
        %v561 = vmax.f32 %v559, %v560
        %v562 = vrot.slane %v561, 1
        %v563 = vmax.f32 %v561, %v562
        %v564 = vld [vmem:[%s2] sm:$0x1]
        %v566 = vlaneseq
        %v567 = vshrl.u32 %v566, 7
        %v568 = vsub.s32 0, %v567
        %v569 = vrot.slane %v564, %v568
        %v571 = vadd.f32 %v514, %v569
        %v572 = vadd.f32 %v521, %v569
        %v573 = vadd.f32 %v528, %v569
        %v574 = vadd.f32 %v535, %v569
        %v575 = vadd.f32 %v542, %v569
        %v576 = vadd.f32 %v549, %v569
        %v577 = vadd.f32 %v556, %v569
        %v578 = vadd.f32 %v563, %v569
        %v579 = vmax.f32 %v571, 0.0
        %v580 = vmax.f32 %v572, 0.0
        %v581 = vmax.f32 %v573, 0.0
        %v582 = vmax.f32 %v574, 0.0
        %v583 = vmax.f32 %v575, 0.0
        %v584 = vmax.f32 %v576, 0.0
        %v585 = vmax.f32 %v577, 0.0
        %v586 = vmax.f32 %v578, 0.0
        %587 = vst.msk [vmem:[#allocation4] sm:$0x3] %vm507, 0.0
        %588 = vst.msk [vmem:[#allocation4 + $0xa] sm:$0x3] %vm507, 0.0
        %v597 = vrot.slane %v580, 7
        %vm598 = vcmask 1041409
        %v599 = vsel %vm598, %v597, %v579
        %v600 = vrot.slane %v581, 6
        %vm601 = vcmask 1042434
        %v602 = vsel %vm601, %v600, %v599
        %v603 = vrot.slane %v582, 5
        %vm604 = vcmask 1043459
        %v605 = vsel %vm604, %v603, %v602
        %v606 = vrot.slane %v583, 4
        %vm607 = vcmask 1044484
        %v608 = vsel %vm607, %v606, %v605
        %v609 = vrot.slane %v584, 3
        %vm610 = vcmask 1045509
        %v611 = vsel %vm610, %v609, %v608
        %v612 = vrot.slane %v585, 2
        %vm613 = vcmask 1046534
        %v614 = vsel %vm613, %v612, %v611
        %v615 = vrot.slane %v586, 1
        %vm616 = vcmask 1047559
        %v617 = vsel %vm616, %v615, %v614
        %vm619 = vcmask 523264
        %620 = vst.msk [vmem:[#allocation4 + $0x2] sm:$0xff] %vm619, %v617
        %v621 = vld [vmem:[#allocation4] sm:$0xff]
        %v622 = vld [vmem:[#allocation4 + $0x1] sm:$0xff]
        %624 = vrot.lane.b32.xlu0 %v622, 64
        %v625 = vpop.permute.xlu0 %624
        %v627 = vsel %vm619, %v621, %v625
        %628 = vst [vmem:[#allocation5] sm:$0xff] %v627
        %v629 = vld [vmem:[#allocation4 + $0x2] sm:$0xff]
        %v630 = vld [vmem:[#allocation4 + $0x3] sm:$0xff]
        %632 = vrot.lane.b32.xlu0 %v630, 64
        %v633 = vpop.permute.xlu0 %632
        %v635 = vsel %vm619, %v629, %v633
        %636 = vst [vmem:[#allocation5 + $0x8] sm:$0xff] %v635
        %v637 = vld [vmem:[#allocation4 + $0x4] sm:$0xff]
        %638 = vst.msk [vmem:[#allocation5 + $0x10] sm:$0xff] %vm619, %v637
        %v639 = vld [vmem:[#allocation5] sm:$0xff]
        %v640 = vld [vmem:[#allocation5 + $0x8] sm:$0xff]
        %v641 = vld [vmem:[#allocation5 + $0x10] sm:$0xff]
        %v642 = vld [vmem:[#allocation8] sm:$0xff]
        %v643 = vld [vmem:[#allocation8 + $0x8] sm:$0xff]
        %v644 = vld [vmem:[#allocation8 + $0x10] sm:$0xff]
        %v645 = vld [vmem:[#allocation8 + $0x18] sm:$0xff]
        %v646 = vld [vmem:[#allocation8 + $0x20] sm:$0xff]
        %v647 = vld [vmem:[#allocation8 + $0x28] sm:$0xff]
        %v648 = vld [vmem:[#allocation8 + $0x30] sm:$0xff]
        %v649 = vld [vmem:[#allocation8 + $0x38] sm:$0xff]
        %v650 = vld [vmem:[#allocation8 + $0x40] sm:$0xff]
        %v651 = vld [vmem:[#allocation8 + $0x48] sm:$0xff]
        %v652 = vld [vmem:[#allocation8 + $0x50] sm:$0xff]
        %v653 = vld [vmem:[#allocation8 + $0x58] sm:$0xff]
        %v654 = vld [vmem:[#allocation8 + $0x60] sm:$0xff]
        %v655 = vld [vmem:[#allocation8 + $0x68] sm:$0xff]
        %v656 = vld [vmem:[#allocation8 + $0x70] sm:$0xff]
        %v657 = vld [vmem:[#allocation8 + $0x78] sm:$0xff]
        %v658 = vld [vmem:[#allocation8 + $0x80] sm:$0xff]
        %v659 = vld [vmem:[#allocation8 + $0x88] sm:$0xff]
        %v660 = vld [vmem:[#allocation8 + $0x90] sm:$0xff]
        %v661 = vld [vmem:[#allocation8 + $0x98] sm:$0xff]
        %v662 = vld [vmem:[#allocation8 + $0xa0] sm:$0xff]
        %v663 = vld [vmem:[#allocation8 + $0xa8] sm:$0xff]
        %v664 = vld [vmem:[#allocation8 + $0xb0] sm:$0xff]
        %v665 = vld [vmem:[#allocation8 + $0xb8] sm:$0xff]
        %v666 = vld [vmem:[#allocation8 + $0xc0] sm:$0xff]
        %v667 = vld [vmem:[#allocation8 + $0xc8] sm:$0xff]
        %v668 = vld [vmem:[#allocation8 + $0xd0] sm:$0xff]
        %v669 = vld [vmem:[#allocation8 + $0xd8] sm:$0xff]
        %v670 = vld [vmem:[#allocation8 + $0xe0] sm:$0xff]
        %v671 = vld [vmem:[#allocation8 + $0xe8] sm:$0xff]
        %v672 = vld [vmem:[#allocation8 + $0xf0] sm:$0xff]
        %v673 = vld [vmem:[#allocation8 + $0xf8] sm:$0xff]
        %v674 = vld [vmem:[#allocation8 + $0x100] sm:$0xff]
        %v675 = vld [vmem:[#allocation8 + $0x108] sm:$0xff]
        %v676 = vld [vmem:[#allocation8 + $0x110] sm:$0xff]
        %v677 = vld [vmem:[#allocation8 + $0x118] sm:$0xff]
        %v678 = vld [vmem:[#allocation8 + $0x120] sm:$0xff]
        %v679 = vld [vmem:[#allocation8 + $0x128] sm:$0xff]
        %v680 = vld [vmem:[#allocation8 + $0x130] sm:$0xff]
        %v681 = vld [vmem:[#allocation8 + $0x138] sm:$0xff]
        %v683 = vsel %vm619, %v641, 0
        %685 = vmatprep.subr.mxu0 0.0
        %686 = vmatpush1.msra.mxu0 %v642
        %687 = vmatprep.subr.mxu0 0.0
        %688 = vmatpush1.msra.mxu0 %v643
        %689 = vmatprep.subr.mxu0 0.0
        %690 = vmatpush1.msra.mxu0 %v644
        %691 = vmatprep.subr.mxu0 0.0
        %692 = vmatpush1.msra.mxu0 %v645
        %693 = vmatprep.subr.mxu0 0.0
        %694 = vmatpush1.msra.mxu0 %v646
        %695 = vmatprep.subr.mxu0 0.0
        %696 = vmatpush1.msra.mxu0 %v647
        %697 = vmatprep.subr.mxu0 0.0
        %698 = vmatpush1.msra.mxu0 %v648
        %699 = vmatprep.subr.mxu0 0.0
        %700 = vmatpush1.msra.mxu0 %v649
        %701 = vmatprep.subr.mxu0 0.0
        %702 = vmatpush1.msra.mxu0 %v650
        %703 = vmatprep.subr.mxu0 0.0
        %704 = vmatpush1.msra.mxu0 %v651
        %705 = vmatprep.subr.mxu0 0.0
        %706 = vmatpush1.msra.mxu0 %v652
        %707 = vmatprep.subr.mxu0 0.0
        %708 = vmatpush1.msra.mxu0 %v653
        %709 = vmatprep.subr.mxu0 0.0
        %710 = vmatpush1.msra.mxu0 %v654
        %711 = vmatprep.subr.mxu0 0.0
        %712 = vmatpush1.msra.mxu0 %v655
        %713 = vmatprep.subr.mxu0 0.0
        %714 = vmatpush1.msra.mxu0 %v656
        %715 = vmatprep.subr.mxu0 0.0
        %716 = vmatpush1.msra.mxu0 %v657
        %717 = vmatprep.subr.mxu0 0.0
        %718 = vmatpush1.msra.mxu0 %v658
        %719 = vmatprep.subr.mxu0 0.0
        %720 = vmatpush1.msra.mxu0 %v659
        %721 = vmatprep.subr.mxu0 0.0
        %722 = vmatpush1.msra.mxu0 %v660
        %723 = vmatprep.subr.mxu0 0.0
        %724 = vmatpush1.msra.mxu0 %v661
        %725 = vmatprep.subr.mxu0 0.0
        %726 = vmatpush1.msra.mxu0 %v662
        %727 = vmatprep.subr.mxu0 0.0
        %728 = vmatpush1.msra.mxu0 %v663
        %729 = vmatprep.subr.mxu0 0.0
        %730 = vmatpush1.msra.mxu0 %v664
        %731 = vmatprep.subr.mxu0 0.0
        %732 = vmatpush1.msra.mxu0 %v665
        %733 = vmatprep.subr.mxu0 0.0
        %734 = vmatpush1.msra.mxu0 %v666
        %735 = vmatprep.subr.mxu0 0.0
        %736 = vmatpush1.msra.mxu0 %v667
        %737 = vmatprep.subr.mxu0 0.0
        %738 = vmatpush1.msra.mxu0 %v668
        %739 = vmatprep.subr.mxu0 0.0
        %740 = vmatpush1.msra.mxu0 %v669
        %741 = vmatprep.subr.mxu0 0.0
        %742 = vmatpush1.msra.mxu0 %v670
        %743 = vmatprep.subr.mxu0 0.0
        %744 = vmatpush1.msra.mxu0 %v671
        %745 = vmatprep.subr.mxu0 0.0
        %746 = vmatpush1.msra.mxu0 %v672
        %747 = vmatprep.subr.mxu0 0.0
        %748 = vmatpush1.msra.mxu0 %v673
        %749 = vmatprep.mubr.f32.mxu0 %v640
        %750 = vmatmul.mubr.f32.gmra.mrb[0].mxu0 %v639
        %v751 = vpop.f32.mrb[0].mxu0
        %v752 = vadd.f32 0.0, %v751
        %v753 = vpop.f32.mrb[0].mxu0
        %754 = vdwg.mxu0
        %755 = vmatprep.subr.mxu0 0.0
        %756 = vmatpush1.msra.mxu0 %v674
        %757 = vmatprep.subr.mxu0 0.0
        %758 = vmatpush1.msra.mxu0 %v675
        %759 = vmatprep.subr.mxu0 0.0
        %760 = vmatpush1.msra.mxu0 %v676
        %761 = vmatprep.subr.mxu0 0.0
        %762 = vmatpush1.msra.mxu0 %v677
        %763 = vmatprep.subr.mxu0 0.0
        %764 = vmatpush1.msra.mxu0 %v678
        %765 = vmatprep.subr.mxu0 0.0
        %766 = vmatpush1.msra.mxu0 %v679
        %767 = vmatprep.subr.mxu0 0.0
        %768 = vmatpush1.msra.mxu0 %v680
        %769 = vmatprep.subr.mxu0 0.0
        %770 = vmatpush1.msra.mxu0 %v681
        %771 = vmatprep.subr.mxu0 0.0
        %772 = vmatpush1.msra.mxu0 0.0
        %773 = vmatprep.subr.mxu0 0.0
        %774 = vmatpush1.msra.mxu0 0.0
        %775 = vmatprep.subr.mxu0 0.0
        %776 = vmatpush1.msra.mxu0 0.0
        %777 = vmatprep.subr.mxu0 0.0
        %778 = vmatpush1.msra.mxu0 0.0
        %779 = vmatprep.subr.mxu0 0.0
        %780 = vmatpush1.msra.mxu0 0.0
        %781 = vmatprep.subr.mxu0 0.0
        %782 = vmatpush1.msra.mxu0 0.0
        %783 = vmatprep.subr.mxu0 0.0
        %784 = vmatpush1.msra.mxu0 0.0
        %785 = vmatprep.subr.mxu0 0.0
        %786 = vmatpush1.msra.mxu0 0.0
        %787 = vmatprep.subr.mxu0 0.0
        %788 = vmatpush1.msra.mxu0 0.0
        %789 = vmatprep.subr.mxu0 0.0
        %790 = vmatpush1.msra.mxu0 0.0
        %791 = vmatprep.subr.mxu0 0.0
        %792 = vmatpush1.msra.mxu0 0.0
        %793 = vmatprep.subr.mxu0 0.0
        %794 = vmatpush1.msra.mxu0 0.0
        %795 = vmatprep.subr.mxu0 0.0
        %796 = vmatpush1.msra.mxu0 0.0
        %797 = vmatprep.subr.mxu0 0.0
        %798 = vmatpush1.msra.mxu0 0.0
        %799 = vmatprep.subr.mxu0 0.0
        %800 = vmatpush1.msra.mxu0 0.0
        %801 = vmatprep.subr.mxu0 0.0
        %802 = vmatpush1.msra.mxu0 0.0
        %803 = vmatprep.subr.mxu0 0.0
        %804 = vmatpush1.msra.mxu0 0.0
        %805 = vmatprep.subr.mxu0 0.0
        %806 = vmatpush1.msra.mxu0 0.0
        %807 = vmatprep.subr.mxu0 0.0
        %808 = vmatpush1.msra.mxu0 0.0
        %809 = vmatprep.subr.mxu0 0.0
        %810 = vmatpush1.msra.mxu0 0.0
        %811 = vmatprep.subr.mxu0 0.0
        %812 = vmatpush1.msra.mxu0 0.0
        %813 = vmatprep.subr.mxu0 0.0
        %814 = vmatpush1.msra.mxu0 0.0
        %815 = vmatprep.subr.mxu0 0.0
        %816 = vmatpush1.msra.mxu0 0.0
        %817 = vmatprep.subr.mxu0 0.0
        %818 = vmatpush1.msra.mxu0 0.0
        %819 = vmatprep.mubr.f32.mxu0 0.0
        %820 = vmatmul.mubr.f32.gmra.mrb[0].mxu0 %v683
        %v821 = vpop.f32.mrb[0].mxu0
        %v822 = vadd.f32 %v752, %v821
        %v823 = vpop.f32.mrb[0].mxu0
        %824 = vdwg.mxu0
        %v826 = vcombine.high %v822, %v822
        %v828 = vunpack.c.l.s4 1983009808
        %v829 = vunpack.c.0.s8 %v828
        %v830 = vlaneseq
        %v831 = vshrl.u32 %v830, 7
        %v832 = vsub.s32 %v829, %v831
        %v833 = vrot.slane %v822, %v832
        %v835 = vunpack.c.l.s4 1983009808
        %v836 = vunpack.c.0.s8 %v835
        %v837 = vlaneseq
        %v838 = vshrl.u32 %v837, 7
        %v839 = vsub.s32 %v836, %v838
        %v840 = vrot.slane %v826, %v839
        %v841 = vcombine.high %v833, %v833
        %v842 = vcombine.high %v840, %v840
        %vm847 = vcmask 1041408
        %v848 = vsel %vm847, %v833, -inf
        %v849 = vrot.slane %v848, 4
        %v850 = vmax.f32 %v848, %v849
        %v851 = vrot.slane %v850, 2
        %v852 = vmax.f32 %v850, %v851
        %v853 = vrot.slane %v852, 1
        %v854 = vmax.f32 %v852, %v853
        %v855 = vsel %vm847, %v841, -inf
        %v856 = vrot.slane %v855, 4
        %v857 = vmax.f32 %v855, %v856
        %v858 = vrot.slane %v857, 2
        %v859 = vmax.f32 %v857, %v858
        %v860 = vrot.slane %v859, 1
        %v861 = vmax.f32 %v859, %v860
        %v862 = vsel %vm847, %v840, -inf
        %v863 = vrot.slane %v862, 4
        %v864 = vmax.f32 %v862, %v863
        %v865 = vrot.slane %v864, 2
        %v866 = vmax.f32 %v864, %v865
        %v867 = vrot.slane %v866, 1
        %v868 = vmax.f32 %v866, %v867
        %v869 = vsel %vm847, %v842, -inf
        %v870 = vrot.slane %v869, 4
        %v871 = vmax.f32 %v869, %v870
        %v872 = vrot.slane %v871, 2
        %v873 = vmax.f32 %v871, %v872
        %v874 = vrot.slane %v873, 1
        %v875 = vmax.f32 %v873, %v874
        %v876 = vld [vmem:[%s4] sm:$0x1]
        %v878 = vlaneseq
        %v879 = vshrl.u32 %v878, 7
        %v880 = vsub.s32 0, %v879
        %v881 = vrot.slane %v876, %v880
        %v883 = vadd.f32 %v854, %v881
        %v884 = vadd.f32 %v861, %v881
        %v885 = vadd.f32 %v868, %v881
        %v886 = vadd.f32 %v875, %v881
        %v887 = vmax.f32 %v883, 0.0
        %v888 = vmax.f32 %v884, 0.0
        %v889 = vmax.f32 %v885, 0.0
        %v890 = vmax.f32 %v886, 0.0
        %891 = vst [vmem:[#allocation6] sm:$0x3] 0.0
        %892 = vst [vmem:[#allocation6 + $0x6] sm:$0x3] 0.0
        %v897 = vrot.slane %v888, 7
        %v898 = vsel %vm598, %v897, %v887
        %v899 = vrot.slane %v889, 6
        %v900 = vsel %vm601, %v899, %v898
        %v901 = vrot.slane %v890, 5
        %v902 = vsel %vm604, %v901, %v900
        %904 = vst [vmem:[#allocation6 + $0x2] sm:$0xf] %v902
        %v905 = vld [vmem:[#allocation6] sm:$0xf]
        %906 = vst [vmem:[#allocation7] sm:$0xf] %v905
        %v907 = vld [vmem:[#allocation6 + $0x1] sm:$0xf]
        %908 = vst [vmem:[#allocation7 + $0x4] sm:$0xf] %v907
        %v909 = vld [vmem:[#allocation6 + $0x2] sm:$0xf]
        %910 = vst [vmem:[#allocation7 + $0x8] sm:$0xf] %v909
        %v911 = vld [vmem:[#allocation6 + $0x3] sm:$0xf]
        %912 = vst [vmem:[#allocation7 + $0xc] sm:$0xf] %v911
        %v913 = vld [vmem:[#allocation6 + $0x4] sm:$0xf]
        %914 = vst [vmem:[#allocation7 + $0x10] sm:$0xf] %v913
        %v915 = vld [vmem:[#allocation7] sm:$0xff]
        %v916 = vld [vmem:[#allocation7 + $0x8] sm:$0xff]
        %v917 = vld [vmem:[#allocation7 + $0x10] sm:$0xf]
        %v918 = vld [vmem:[#allocation10] sm:$0xff]
        %v919 = vld [vmem:[#allocation10 + $0x8] sm:$0xff]
        %v920 = vld [vmem:[#allocation10 + $0x10] sm:$0xff]
        %v921 = vld [vmem:[#allocation10 + $0x18] sm:$0xff]
        %v922 = vld [vmem:[#allocation10 + $0x20] sm:$0xff]
        %v923 = vld [vmem:[#allocation10 + $0x28] sm:$0xff]
        %v924 = vld [vmem:[#allocation10 + $0x30] sm:$0xff]
        %v925 = vld [vmem:[#allocation10 + $0x38] sm:$0xff]
        %v926 = vld [vmem:[#allocation10 + $0x40] sm:$0xff]
        %v927 = vld [vmem:[#allocation10 + $0x48] sm:$0xff]
        %v928 = vld [vmem:[#allocation10 + $0x50] sm:$0xff]
        %v929 = vld [vmem:[#allocation10 + $0x58] sm:$0xff]
        %v930 = vld [vmem:[#allocation10 + $0x60] sm:$0xff]
        %v931 = vld [vmem:[#allocation10 + $0x68] sm:$0xff]
        %v932 = vld [vmem:[#allocation10 + $0x70] sm:$0xff]
        %v933 = vld [vmem:[#allocation10 + $0x78] sm:$0xff]
        %v934 = vld [vmem:[#allocation10 + $0x80] sm:$0xff]
        %v935 = vld [vmem:[#allocation10 + $0x88] sm:$0xff]
        %v936 = vld [vmem:[#allocation10 + $0x90] sm:$0xff]
        %v937 = vld [vmem:[#allocation10 + $0x98] sm:$0xff]
        %v938 = vld [vmem:[#allocation10 + $0xa0] sm:$0xff]
        %v939 = vld [vmem:[#allocation10 + $0xa8] sm:$0xff]
        %v940 = vld [vmem:[#allocation10 + $0xb0] sm:$0xff]
        %v941 = vld [vmem:[#allocation10 + $0xb8] sm:$0xff]
        %v942 = vld [vmem:[#allocation10 + $0xc0] sm:$0xff]
        %v943 = vld [vmem:[#allocation10 + $0xc8] sm:$0xff]
        %v944 = vld [vmem:[#allocation10 + $0xd0] sm:$0xff]
        %v945 = vld [vmem:[#allocation10 + $0xd8] sm:$0xff]
        %v946 = vld [vmem:[#allocation10 + $0xe0] sm:$0xff]
        %v947 = vld [vmem:[#allocation10 + $0xe8] sm:$0xff]
        %v948 = vld [vmem:[#allocation10 + $0xf0] sm:$0xff]
        %v949 = vld [vmem:[#allocation10 + $0xf8] sm:$0xff]
        %v950 = vld [vmem:[#allocation10 + $0x100] sm:$0xff]
        %v951 = vld [vmem:[#allocation10 + $0x108] sm:$0xff]
        %v952 = vld [vmem:[#allocation10 + $0x110] sm:$0xff]
        %v953 = vld [vmem:[#allocation10 + $0x118] sm:$0xff]
        %v954 = vld [vmem:[#allocation10 + $0x120] sm:$0xff]
        %v955 = vld [vmem:[#allocation10 + $0x128] sm:$0xff]
        %v956 = vld [vmem:[#allocation10 + $0x130] sm:$0xff]
        %v957 = vld [vmem:[#allocation10 + $0x138] sm:$0xff]
        %v958 = vld [vmem:[#allocation10 + $0x140] sm:$0xff]
        %v959 = vld [vmem:[#allocation10 + $0x148] sm:$0xff]
        %v960 = vld [vmem:[#allocation10 + $0x150] sm:$0xff]
        %v961 = vld [vmem:[#allocation10 + $0x158] sm:$0xff]
        %v962 = vld [vmem:[#allocation10 + $0x160] sm:$0xff]
        %v963 = vld [vmem:[#allocation10 + $0x168] sm:$0xff]
        %v964 = vld [vmem:[#allocation10 + $0x170] sm:$0xff]
        %v965 = vld [vmem:[#allocation10 + $0x178] sm:$0xff]
        %v966 = vld [vmem:[#allocation10 + $0x180] sm:$0xff]
        %v967 = vld [vmem:[#allocation10 + $0x188] sm:$0xff]
        %v968 = vld [vmem:[#allocation10 + $0x190] sm:$0xff]
        %v969 = vld [vmem:[#allocation10 + $0x198] sm:$0xff]
        %v970 = vld [vmem:[#allocation10 + $0x1a0] sm:$0xff]
        %v971 = vld [vmem:[#allocation10 + $0x1a8] sm:$0xff]
        %v972 = vld [vmem:[#allocation10 + $0x1b0] sm:$0xff]
        %v973 = vld [vmem:[#allocation10 + $0x1b8] sm:$0xff]
        %v974 = vld [vmem:[#allocation10 + $0x1c0] sm:$0xff]
        %v975 = vld [vmem:[#allocation10 + $0x1c8] sm:$0xff]
        %v976 = vld [vmem:[#allocation10 + $0x1d0] sm:$0xff]
        %v977 = vld [vmem:[#allocation10 + $0x1d8] sm:$0xff]
        %v978 = vld [vmem:[#allocation10 + $0x1e0] sm:$0xff]
        %v979 = vld [vmem:[#allocation10 + $0x1e8] sm:$0xff]
        %v980 = vld [vmem:[#allocation10 + $0x1f0] sm:$0xff]
        %v981 = vld [vmem:[#allocation10 + $0x1f8] sm:$0xff]
        %v982 = vld [vmem:[#allocation10 + $0x200] sm:$0xff]
        %v983 = vld [vmem:[#allocation10 + $0x208] sm:$0xff]
        %v984 = vld [vmem:[#allocation10 + $0x210] sm:$0xff]
        %v985 = vld [vmem:[#allocation10 + $0x218] sm:$0xff]
        %v986 = vld [vmem:[#allocation10 + $0x220] sm:$0xff]
        %v987 = vld [vmem:[#allocation10 + $0x228] sm:$0xff]
        %v988 = vld [vmem:[#allocation10 + $0x230] sm:$0xff]
        %v989 = vld [vmem:[#allocation10 + $0x238] sm:$0xff]
        %v990 = vld [vmem:[#allocation10 + $0x240] sm:$0xff]
        %v991 = vld [vmem:[#allocation10 + $0x248] sm:$0xff]
        %v992 = vld [vmem:[#allocation10 + $0x250] sm:$0xff]
        %v993 = vld [vmem:[#allocation10 + $0x258] sm:$0xff]
        %v994 = vld [vmem:[#allocation10 + $0x260] sm:$0xff]
        %v995 = vld [vmem:[#allocation10 + $0x268] sm:$0xff]
        %v996 = vld [vmem:[#allocation10 + $0x270] sm:$0xff]
        %v997 = vld [vmem:[#allocation10 + $0x278] sm:$0xff]
        %v998 = vld [vmem:[#allocation10 + $0x280] sm:$0xff]
        %v999 = vld [vmem:[#allocation10 + $0x288] sm:$0xff]
        %v1000 = vld [vmem:[#allocation10 + $0x290] sm:$0xff]
        %v1001 = vld [vmem:[#allocation10 + $0x298] sm:$0xff]
        %v1002 = vld [vmem:[#allocation10 + $0x2a0] sm:$0xff]
        %v1003 = vld [vmem:[#allocation10 + $0x2a8] sm:$0xff]
        %v1004 = vld [vmem:[#allocation10 + $0x2b0] sm:$0xff]
        %v1005 = vld [vmem:[#allocation10 + $0x2b8] sm:$0xff]
        %v1006 = vld [vmem:[#allocation10 + $0x2c0] sm:$0xff]
        %v1007 = vld [vmem:[#allocation10 + $0x2c8] sm:$0xff]
        %v1008 = vld [vmem:[#allocation10 + $0x2d0] sm:$0xff]
        %v1009 = vld [vmem:[#allocation10 + $0x2d8] sm:$0xff]
        %v1010 = vld [vmem:[#allocation10 + $0x2e0] sm:$0xff]
        %v1011 = vld [vmem:[#allocation10 + $0x2e8] sm:$0xff]
        %v1012 = vld [vmem:[#allocation10 + $0x2f0] sm:$0xff]
        %v1013 = vld [vmem:[#allocation10 + $0x2f8] sm:$0xff]
        %v1014 = vld [vmem:[#allocation10 + $0x300] sm:$0xff]
        %v1015 = vld [vmem:[#allocation10 + $0x308] sm:$0xff]
        %v1016 = vld [vmem:[#allocation10 + $0x310] sm:$0xff]
        %v1017 = vld [vmem:[#allocation10 + $0x318] sm:$0xff]
        %v1018 = vld [vmem:[#allocation10 + $0x320] sm:$0xff]
        %v1019 = vld [vmem:[#allocation10 + $0x328] sm:$0xff]
        %v1020 = vld [vmem:[#allocation10 + $0x330] sm:$0xff]
        %v1021 = vld [vmem:[#allocation10 + $0x338] sm:$0xff]
        %v1022 = vld [vmem:[#allocation10 + $0x340] sm:$0xff]
        %v1023 = vld [vmem:[#allocation10 + $0x348] sm:$0xff]
        %v1024 = vld [vmem:[#allocation10 + $0x350] sm:$0xff]
        %v1025 = vld [vmem:[#allocation10 + $0x358] sm:$0xff]
        %v1026 = vld [vmem:[#allocation10 + $0x360] sm:$0xff]
        %v1027 = vld [vmem:[#allocation10 + $0x368] sm:$0xff]
        %v1028 = vld [vmem:[#allocation10 + $0x370] sm:$0xff]
        %v1029 = vld [vmem:[#allocation10 + $0x378] sm:$0xff]
        %v1030 = vld [vmem:[#allocation10 + $0x380] sm:$0xff]
        %v1031 = vld [vmem:[#allocation10 + $0x388] sm:$0xff]
        %v1032 = vld [vmem:[#allocation10 + $0x390] sm:$0xff]
        %v1033 = vld [vmem:[#allocation10 + $0x398] sm:$0xff]
        %v1034 = vld [vmem:[#allocation10 + $0x3a0] sm:$0xff]
        %v1035 = vld [vmem:[#allocation10 + $0x3a8] sm:$0xff]
        %v1036 = vld [vmem:[#allocation10 + $0x3b0] sm:$0xff]
        %v1037 = vld [vmem:[#allocation10 + $0x3b8] sm:$0xff]
        %v1038 = vld [vmem:[#allocation10 + $0x3c0] sm:$0xff]
        %v1039 = vld [vmem:[#allocation10 + $0x3c8] sm:$0xff]
        %v1040 = vld [vmem:[#allocation10 + $0x3d0] sm:$0xff]
        %v1041 = vld [vmem:[#allocation10 + $0x3d8] sm:$0xff]
        %v1042 = vld [vmem:[#allocation10 + $0x3e0] sm:$0xff]
        %v1043 = vld [vmem:[#allocation10 + $0x3e8] sm:$0xff]
        %v1044 = vld [vmem:[#allocation10 + $0x3f0] sm:$0xff]
        %v1045 = vld [vmem:[#allocation10 + $0x3f8] sm:$0xff]
        %v1046 = vld [vmem:[#allocation10 + $0x400] sm:$0xff]
        %v1047 = vld [vmem:[#allocation10 + $0x408] sm:$0xff]
        %v1048 = vld [vmem:[#allocation10 + $0x410] sm:$0xff]
        %v1049 = vld [vmem:[#allocation10 + $0x418] sm:$0xff]
        %v1050 = vld [vmem:[#allocation10 + $0x420] sm:$0xff]
        %v1051 = vld [vmem:[#allocation10 + $0x428] sm:$0xff]
        %v1052 = vld [vmem:[#allocation10 + $0x430] sm:$0xff]
        %v1053 = vld [vmem:[#allocation10 + $0x438] sm:$0xff]
        %v1054 = vld [vmem:[#allocation10 + $0x440] sm:$0xff]
        %v1055 = vld [vmem:[#allocation10 + $0x448] sm:$0xff]
        %v1056 = vld [vmem:[#allocation10 + $0x450] sm:$0xff]
        %v1057 = vld [vmem:[#allocation10 + $0x458] sm:$0xff]
        %v1058 = vld [vmem:[#allocation10 + $0x460] sm:$0xff]
        %v1059 = vld [vmem:[#allocation10 + $0x468] sm:$0xff]
        %v1060 = vld [vmem:[#allocation10 + $0x470] sm:$0xff]
        %v1061 = vld [vmem:[#allocation10 + $0x478] sm:$0xff]
        %v1062 = vld [vmem:[#allocation10 + $0x480] sm:$0xff]
        %v1063 = vld [vmem:[#allocation10 + $0x488] sm:$0xff]
        %v1064 = vld [vmem:[#allocation10 + $0x490] sm:$0xff]
        %v1065 = vld [vmem:[#allocation10 + $0x498] sm:$0xff]
        %v1066 = vld [vmem:[#allocation10 + $0x4a0] sm:$0xff]
        %v1067 = vld [vmem:[#allocation10 + $0x4a8] sm:$0xff]
        %v1068 = vld [vmem:[#allocation10 + $0x4b0] sm:$0xff]
        %v1069 = vld [vmem:[#allocation10 + $0x4b8] sm:$0xff]
        %v1070 = vld [vmem:[#allocation10 + $0x4c0] sm:$0xff]
        %v1071 = vld [vmem:[#allocation10 + $0x4c8] sm:$0xff]
        %v1072 = vld [vmem:[#allocation10 + $0x4d0] sm:$0xff]
        %v1073 = vld [vmem:[#allocation10 + $0x4d8] sm:$0xff]
        %v1074 = vld [vmem:[#allocation10 + $0x4e0] sm:$0xff]
        %v1075 = vld [vmem:[#allocation10 + $0x4e8] sm:$0xff]
        %v1076 = vld [vmem:[#allocation10 + $0x4f0] sm:$0xff]
        %v1077 = vld [vmem:[#allocation10 + $0x4f8] sm:$0xff]
        %v1080 = vcombine.high %v915, %v915
        %v1081 = vcombine.high %v916, %v916
        %1084 = vmatprep.subr.mxu0 %v919
        %1085 = vmatpush1.msra.mxu0 %v918
        %1086 = vmatprep.subr.mxu0 %v921
        %1087 = vmatpush1.msra.mxu0 %v920
        %1088 = vmatprep.subr.mxu0 %v923
        %1089 = vmatpush1.msra.mxu0 %v922
        %1090 = vmatprep.subr.mxu0 %v925
        %1091 = vmatpush1.msra.mxu0 %v924
        %1092 = vmatprep.subr.mxu0 %v927
        %1093 = vmatpush1.msra.mxu0 %v926
        %1094 = vmatprep.subr.mxu0 %v929
        %1095 = vmatpush1.msra.mxu0 %v928
        %1096 = vmatprep.subr.mxu0 %v931
        %1097 = vmatpush1.msra.mxu0 %v930
        %1098 = vmatprep.subr.mxu0 %v933
        %1099 = vmatpush1.msra.mxu0 %v932
        %1100 = vmatprep.subr.mxu0 %v935
        %1101 = vmatpush1.msra.mxu0 %v934
        %1102 = vmatprep.subr.mxu0 %v937
        %1103 = vmatpush1.msra.mxu0 %v936
        %1104 = vmatprep.subr.mxu0 %v939
        %1105 = vmatpush1.msra.mxu0 %v938
        %1106 = vmatprep.subr.mxu0 %v941
        %1107 = vmatpush1.msra.mxu0 %v940
        %1108 = vmatprep.subr.mxu0 %v943
        %1109 = vmatpush1.msra.mxu0 %v942
        %1110 = vmatprep.subr.mxu0 %v945
        %1111 = vmatpush1.msra.mxu0 %v944
        %1112 = vmatprep.subr.mxu0 %v947
        %1113 = vmatpush1.msra.mxu0 %v946
        %1114 = vmatprep.subr.mxu0 %v949
        %1115 = vmatpush1.msra.mxu0 %v948
        %1116 = vmatprep.subr.mxu0 %v951
        %1117 = vmatpush1.msra.mxu0 %v950
        %1118 = vmatprep.subr.mxu0 %v953
        %1119 = vmatpush1.msra.mxu0 %v952
        %1120 = vmatprep.subr.mxu0 %v955
        %1121 = vmatpush1.msra.mxu0 %v954
        %1122 = vmatprep.subr.mxu0 %v957
        %1123 = vmatpush1.msra.mxu0 %v956
        %1124 = vmatprep.subr.mxu0 %v959
        %1125 = vmatpush1.msra.mxu0 %v958
        %1126 = vmatprep.subr.mxu0 %v961
        %1127 = vmatpush1.msra.mxu0 %v960
        %1128 = vmatprep.subr.mxu0 %v963
        %1129 = vmatpush1.msra.mxu0 %v962
        %1130 = vmatprep.subr.mxu0 %v965
        %1131 = vmatpush1.msra.mxu0 %v964
        %1132 = vmatprep.subr.mxu0 %v967
        %1133 = vmatpush1.msra.mxu0 %v966
        %1134 = vmatprep.subr.mxu0 %v969
        %1135 = vmatpush1.msra.mxu0 %v968
        %1136 = vmatprep.subr.mxu0 %v971
        %1137 = vmatpush1.msra.mxu0 %v970
        %1138 = vmatprep.subr.mxu0 %v973
        %1139 = vmatpush1.msra.mxu0 %v972
        %1140 = vmatprep.subr.mxu0 %v975
        %1141 = vmatpush1.msra.mxu0 %v974
        %1142 = vmatprep.subr.mxu0 %v977
        %1143 = vmatpush1.msra.mxu0 %v976
        %1144 = vmatprep.subr.mxu0 %v979
        %1145 = vmatpush1.msra.mxu0 %v978
        %1146 = vmatprep.subr.mxu0 %v981
        %1147 = vmatpush1.msra.mxu0 %v980
        %1148 = vmatprep.mubr.f32.mxu0 %v1080
        %1149 = vmatmul.mubr.f32.gmra.mrb[0].mxu0 %v915
        %v1150 = vpop.f32.mrb[0].mxu0
        %v1151 = vadd.f32 0.0, %v1150
        %v1152 = vpop.f32.mrb[0].mxu0
        %v1153 = vadd.f32 0.0, %v1152
        %1154 = vdwg.mxu0
        %1155 = vmatprep.subr.mxu0 %v983
        %1156 = vmatpush1.msra.mxu0 %v982
        %1157 = vmatprep.subr.mxu0 %v985
        %1158 = vmatpush1.msra.mxu0 %v984
        %1159 = vmatprep.subr.mxu0 %v987
        %1160 = vmatpush1.msra.mxu0 %v986
        %1161 = vmatprep.subr.mxu0 %v989
        %1162 = vmatpush1.msra.mxu0 %v988
        %1163 = vmatprep.subr.mxu0 %v991
        %1164 = vmatpush1.msra.mxu0 %v990
        %1165 = vmatprep.subr.mxu0 %v993
        %1166 = vmatpush1.msra.mxu0 %v992
        %1167 = vmatprep.subr.mxu0 %v995
        %1168 = vmatpush1.msra.mxu0 %v994
        %1169 = vmatprep.subr.mxu0 %v997
        %1170 = vmatpush1.msra.mxu0 %v996
        %1171 = vmatprep.subr.mxu0 %v999
        %1172 = vmatpush1.msra.mxu0 %v998
        %1173 = vmatprep.subr.mxu0 %v1001
        %1174 = vmatpush1.msra.mxu0 %v1000
        %1175 = vmatprep.subr.mxu0 %v1003
        %1176 = vmatpush1.msra.mxu0 %v1002
        %1177 = vmatprep.subr.mxu0 %v1005
        %1178 = vmatpush1.msra.mxu0 %v1004
        %1179 = vmatprep.subr.mxu0 %v1007
        %1180 = vmatpush1.msra.mxu0 %v1006
        %1181 = vmatprep.subr.mxu0 %v1009
        %1182 = vmatpush1.msra.mxu0 %v1008
        %1183 = vmatprep.subr.mxu0 %v1011
        %1184 = vmatpush1.msra.mxu0 %v1010
        %1185 = vmatprep.subr.mxu0 %v1013
        %1186 = vmatpush1.msra.mxu0 %v1012
        %1187 = vmatprep.subr.mxu0 %v1015
        %1188 = vmatpush1.msra.mxu0 %v1014
        %1189 = vmatprep.subr.mxu0 %v1017
        %1190 = vmatpush1.msra.mxu0 %v1016
        %1191 = vmatprep.subr.mxu0 %v1019
        %1192 = vmatpush1.msra.mxu0 %v1018
        %1193 = vmatprep.subr.mxu0 %v1021
        %1194 = vmatpush1.msra.mxu0 %v1020
        %1195 = vmatprep.subr.mxu0 %v1023
        %1196 = vmatpush1.msra.mxu0 %v1022
        %1197 = vmatprep.subr.mxu0 %v1025
        %1198 = vmatpush1.msra.mxu0 %v1024
        %1199 = vmatprep.subr.mxu0 %v1027
        %1200 = vmatpush1.msra.mxu0 %v1026
        %1201 = vmatprep.subr.mxu0 %v1029
        %1202 = vmatpush1.msra.mxu0 %v1028
        %1203 = vmatprep.subr.mxu0 %v1031
        %1204 = vmatpush1.msra.mxu0 %v1030
        %1205 = vmatprep.subr.mxu0 %v1033
        %1206 = vmatpush1.msra.mxu0 %v1032
        %1207 = vmatprep.subr.mxu0 %v1035
        %1208 = vmatpush1.msra.mxu0 %v1034
        %1209 = vmatprep.subr.mxu0 %v1037
        %1210 = vmatpush1.msra.mxu0 %v1036
        %1211 = vmatprep.subr.mxu0 %v1039
        %1212 = vmatpush1.msra.mxu0 %v1038
        %1213 = vmatprep.subr.mxu0 %v1041
        %1214 = vmatpush1.msra.mxu0 %v1040
        %1215 = vmatprep.subr.mxu0 %v1043
        %1216 = vmatpush1.msra.mxu0 %v1042
        %1217 = vmatprep.subr.mxu0 %v1045
        %1218 = vmatpush1.msra.mxu0 %v1044
        %1219 = vmatprep.mubr.f32.mxu0 %v1081
        %1220 = vmatmul.mubr.f32.gmra.mrb[0].mxu0 %v916
        %v1221 = vpop.f32.mrb[0].mxu0
        %v1222 = vadd.f32 %v1151, %v1221
        %v1223 = vpop.f32.mrb[0].mxu0
        %v1224 = vadd.f32 %v1153, %v1223
        %1225 = vdwg.mxu0
        %1226 = vmatprep.subr.mxu0 %v1047
        %1227 = vmatpush1.msra.mxu0 %v1046
        %1228 = vmatprep.subr.mxu0 %v1049
        %1229 = vmatpush1.msra.mxu0 %v1048
        %1230 = vmatprep.subr.mxu0 %v1051
        %1231 = vmatpush1.msra.mxu0 %v1050
        %1232 = vmatprep.subr.mxu0 %v1053
        %1233 = vmatpush1.msra.mxu0 %v1052
        %1234 = vmatprep.subr.mxu0 %v1055
        %1235 = vmatpush1.msra.mxu0 %v1054
        %1236 = vmatprep.subr.mxu0 %v1057
        %1237 = vmatpush1.msra.mxu0 %v1056
        %1238 = vmatprep.subr.mxu0 %v1059
        %1239 = vmatpush1.msra.mxu0 %v1058
        %1240 = vmatprep.subr.mxu0 %v1061
        %1241 = vmatpush1.msra.mxu0 %v1060
        %1242 = vmatprep.subr.mxu0 %v1063
        %1243 = vmatpush1.msra.mxu0 %v1062
        %1244 = vmatprep.subr.mxu0 %v1065
        %1245 = vmatpush1.msra.mxu0 %v1064
        %1246 = vmatprep.subr.mxu0 %v1067
        %1247 = vmatpush1.msra.mxu0 %v1066
        %1248 = vmatprep.subr.mxu0 %v1069
        %1249 = vmatpush1.msra.mxu0 %v1068
        %1250 = vmatprep.subr.mxu0 %v1071
        %1251 = vmatpush1.msra.mxu0 %v1070
        %1252 = vmatprep.subr.mxu0 %v1073
        %1253 = vmatpush1.msra.mxu0 %v1072
        %1254 = vmatprep.subr.mxu0 %v1075
        %1255 = vmatpush1.msra.mxu0 %v1074
        %1256 = vmatprep.subr.mxu0 %v1077
        %1257 = vmatpush1.msra.mxu0 %v1076
        %1258 = vmatprep.subr.mxu0 0.0
        %1259 = vmatpush1.msra.mxu0 0.0
        %1260 = vmatprep.subr.mxu0 0.0
        %1261 = vmatpush1.msra.mxu0 0.0
        %1262 = vmatprep.subr.mxu0 0.0
        %1263 = vmatpush1.msra.mxu0 0.0
        %1264 = vmatprep.subr.mxu0 0.0
        %1265 = vmatpush1.msra.mxu0 0.0
        %1266 = vmatprep.subr.mxu0 0.0
        %1267 = vmatpush1.msra.mxu0 0.0
        %1268 = vmatprep.subr.mxu0 0.0
        %1269 = vmatpush1.msra.mxu0 0.0
        %1270 = vmatprep.subr.mxu0 0.0
        %1271 = vmatpush1.msra.mxu0 0.0
        %1272 = vmatprep.subr.mxu0 0.0
        %1273 = vmatpush1.msra.mxu0 0.0
        %1274 = vmatprep.subr.mxu0 0.0
        %1275 = vmatpush1.msra.mxu0 0.0
        %1276 = vmatprep.subr.mxu0 0.0
        %1277 = vmatpush1.msra.mxu0 0.0
        %1278 = vmatprep.subr.mxu0 0.0
        %1279 = vmatpush1.msra.mxu0 0.0
        %1280 = vmatprep.subr.mxu0 0.0
        %1281 = vmatpush1.msra.mxu0 0.0
        %1282 = vmatprep.subr.mxu0 0.0
        %1283 = vmatpush1.msra.mxu0 0.0
        %1284 = vmatprep.subr.mxu0 0.0
        %1285 = vmatpush1.msra.mxu0 0.0
        %1286 = vmatprep.subr.mxu0 0.0
        %1287 = vmatpush1.msra.mxu0 0.0
        %1288 = vmatprep.subr.mxu0 0.0
        %1289 = vmatpush1.msra.mxu0 0.0
        %1290 = vmatprep.mubr.f32.mxu0 0.0
        %1291 = vmatmul.mubr.f32.gmra.mrb[0].mxu0 %v917
        %v1292 = vpop.f32.mrb[0].mxu0
        %v1293 = vadd.f32 %v1222, %v1292
        %v1294 = vpop.f32.mrb[0].mxu0
        %v1295 = vadd.f32 %v1224, %v1294
        %1296 = vdwg.mxu0
        %v1299 = vcombine.low %v1293, %v1295
        %v1301 = vunpack.c.l.s4 1983009808
        %v1302 = vunpack.c.0.s8 %v1301
        %v1303 = vlaneseq
        %v1304 = vshrl.u32 %v1303, 7
        %v1305 = vsub.s32 %v1302, %v1304
        %v1306 = vrot.slane %v1299, %v1305
        %v1307 = vcombine.high %v1306, %v1306
        %v1309 = vunpack.c.l.s4 1983009808
        %v1310 = vunpack.c.0.s8 %v1309
        %v1311 = vlaneseq
        %v1312 = vshrl.u32 %v1311, 7
        %v1313 = vsub.s32 %v1310, %v1312
        %v1314 = vrot.slane %v1306, %v1313
        %v1315 = vcombine.high %v1314, %v1314
        %v1317 = vunpack.c.l.s4 1983009808
        %v1318 = vunpack.c.0.s8 %v1317
        %v1319 = vlaneseq
        %v1320 = vshrl.u32 %v1319, 7
        %v1321 = vsub.s32 %v1318, %v1320
        %v1322 = vrot.slane %v1307, %v1321
        %v1323 = vcombine.high %v1322, %v1322
        %v1328 = vsel %vm847, %v1314, -inf
        %v1329 = vrot.slane %v1328, 4
        %v1330 = vmax.f32 %v1328, %v1329
        %v1331 = vrot.slane %v1330, 2
        %v1332 = vmax.f32 %v1330, %v1331
        %v1333 = vrot.slane %v1332, 1
        %v1334 = vmax.f32 %v1332, %v1333
        %v1335 = vsel %vm847, %v1315, -inf
        %v1336 = vrot.slane %v1335, 4
        %v1337 = vmax.f32 %v1335, %v1336
        %v1338 = vrot.slane %v1337, 2
        %v1339 = vmax.f32 %v1337, %v1338
        %v1340 = vrot.slane %v1339, 1
        %v1341 = vmax.f32 %v1339, %v1340
        %v1342 = vsel %vm847, %v1322, -inf
        %v1343 = vrot.slane %v1342, 4
        %v1344 = vmax.f32 %v1342, %v1343
        %v1345 = vrot.slane %v1344, 2
        %v1346 = vmax.f32 %v1344, %v1345
        %v1347 = vrot.slane %v1346, 1
        %v1348 = vmax.f32 %v1346, %v1347
        %v1349 = vsel %vm847, %v1323, -inf
        %v1350 = vrot.slane %v1349, 4
        %v1351 = vmax.f32 %v1349, %v1350
        %v1352 = vrot.slane %v1351, 2
        %v1353 = vmax.f32 %v1351, %v1352
        %v1354 = vrot.slane %v1353, 1
        %v1355 = vmax.f32 %v1353, %v1354
        %v1356 = vld [vmem:[%s6] sm:$0x3]
        %v1358 = vlaneseq
        %v1359 = vshrl.u32 %v1358, 7
        %v1360 = vsub.s32 0, %v1359
        %v1361 = vrot.slane %v1356, %v1360
        %v1362 = vlaneseq
        %v1363 = vshrl.u32 %v1362, 7
        %v1364 = vsub.s32 1, %v1363
        %v1365 = vrot.slane %v1356, %v1364
        %v1368 = vadd.f32 %v1334, %v1361
        %v1369 = vadd.f32 %v1341, %v1365
        %v1370 = vadd.f32 %v1348, %v1361
        %v1371 = vadd.f32 %v1355, %v1365
        %v1372 = vmax.f32 %v1368, 0.0
        %v1373 = vmax.f32 %v1369, 0.0
        %v1374 = vmax.f32 %v1370, 0.0
        %v1375 = vmax.f32 %v1371, 0.0
        %v1380 = vcombine.low %v1372, %v1373
        %v1382 = vunpack.c.l.s4 1983009808
        %v1383 = vunpack.c.0.s8 %v1382
        %v1384 = vlaneseq
        %v1385 = vshrl.u32 %v1384, 7
        %v1386 = vsub.s32 %v1383, %v1385
        %v1387 = vrot.slane %v1380, %v1386
        %v1388 = vcombine.low %v1374, %v1375
        %v1390 = vunpack.c.l.s4 1983009808
        %v1391 = vunpack.c.0.s8 %v1390
        %v1392 = vlaneseq
        %v1393 = vshrl.u32 %v1392, 7
        %v1394 = vsub.s32 %v1391, %v1393
        %v1395 = vrot.slane %v1388, %v1394
        %v1396 = vsel %vm607, %v1387, %v1387
        %v1397 = vsel %vm613, %v1387, %v1396
        %v1398 = vrot.slane %v1395, 7
        %v1399 = vsel %vm598, %v1398, %v1397
        %v1400 = vsel %vm604, %v1398, %v1399
        %v1401 = vsel %vm610, %v1398, %v1400
        %v1402 = vsel %vm616, %v1398, %v1401
        %1404 = vst [vmem:[%s308] sm:$0xf] %v1402
        %p1405 = scmp.lt.s32.totalorder %s20, 1
        %s1406 = scalar_select %p1405, %s20, 1
        %s1407 = smul.addr %s1406, 2
        %s1408 = smul.addr %s1407, 2
        %s1409 = scalar_lea.vmem %s7, %s1408
        // Predicated region
        $region57: #{dna_cnn_forward.2} parent=47 // pred_check
          %p1410 = pneg %p190
        $region58: #{dna_cnn_forward.2} parent=47 // pred_check_branch
          %1412 = sbr.rel (%p1410) target = $region60
        $region59: #{dna_cnn_forward.2} parent=47 // pred_region
          _
        $region60: #{dna_cnn_forward.2} parent=47 // pred_fallthru
          _
      $region48: #{dna_cnn_forward.2} parent=5 // pred_fallthru
        _
      %p1413 = scmp.le.s32.totalorder 2, %s15
      // Predicated region
      $region61: #{dna_cnn_forward.2} parent=5 // pred_check
        %p1414 = pneg %p1413
      $region62: #{dna_cnn_forward.2} parent=5 // pred_check_branch
        %1416 = sbr.rel (%p1414) target = $region64
      $region63: #{dna_cnn_forward.2} parent=5 // pred_region
        %s1417 = ssub.s32 %s15, 2
        // Predicated region
        $region65: #{dna_cnn_forward.2} parent=63 // pred_check
          %p1418 = pneg %p196
        $region66: #{dna_cnn_forward.2} parent=63 // pred_check_branch
          %1420 = sbr.rel (%p1418) target = $region68
        $region67: #{dna_cnn_forward.2} parent=63 // pred_region
          %p1421 = scmp.lt.s32.totalorder %s21, 1
          %s1422 = scalar_select %p1421, %s21, 1
          %s1423 = smul.addr %s1422, 2
          %s1424 = smul.addr %s1423, 2
          %s1425 = scalar_lea.vmem %s7, %s1424
        $region68: #{dna_cnn_forward.2} parent=63 // pred_fallthru
          _
      $region64: #{dna_cnn_forward.2} parent=5 // pred_fallthru
        _
    $region6: #{dna_cnn_forward.2} parent=1 // loop_footer
      %s19 = sadd.s32 1, %s15
    $region7: #{dna_cnn_forward.2} parent=1 // loop_footer_branch
      %14 = sbr.rel target = $region3
    $region8: #{dna_cnn_forward.2} parent=1 // loop_exit
      _
    %1426 = vsyncpa [#allocation9], 1
    %s1427 = scalar_lea.sflag [#allocation9], 1
    %1428 = vsyncpa %s1427, 1
    %1429 = vsyncpa [#allocation11], 1

</llo_original>
